<compile_context>
chip_gen: v7x
topology: tpu7x:2x2x1
jax: 0.10.0
libtpu: 0.0.40
codegen_flags: <defaults>
</compile_context>

<pallas_src>
import jax
import jax.numpy as jnp
from jax.experimental import pallas as pl
from jax.experimental.pallas import tpu as pltpu

IGNORE_INDEX = 255
DICE_WEIGHT = 0.5
CE_WEIGHT = 0.5
EPS = 1e-10


def _round_up(x, m):
    return (x + m - 1) // m * m


def _cdiv(a, b):
    return (a + b - 1) // b


def _make_kernel(B, C, ignore_index):
    def kernel(scalars_ref, logits_ref, labels_ref,
               tc_ref, pc_ref, in_ref, rlgt_ref,
               celse_ref, valid_ref, rcnt_ref):
        n = pl.program_id(1)

        @pl.when(n == 0)
        def _init():
            tc_ref[...] = jnp.zeros_like(tc_ref)
            pc_ref[...] = jnp.zeros_like(pc_ref)
            in_ref[...] = jnp.zeros_like(in_ref)
            rlgt_ref[...] = jnp.zeros_like(rlgt_ref)
            celse_ref[...] = jnp.zeros_like(celse_ref)
            valid_ref[...] = jnp.zeros_like(valid_ref)
            rcnt_ref[...] = jnp.zeros_like(rcnt_ref)

        logits = logits_ref[...].astype(jnp.float32)        # (B, C, T)
        labels = labels_ref[...]                            # (B, T) int32

        # One-hot compare, built once.  Tail padding uses label == -1, which never
        # matches a class and is not IGNORE, so no per-tile position mask is needed.
        cls = jax.lax.broadcasted_iota(jnp.int32, (1, C, 1), 1)
        eq = (cls == labels[:, None, :]).astype(jnp.float32)   # (B, C, T)

        # ---------- generalized-dice partial sums (eq-based) ----------
        # The ignore->lmin remap is applied as a correction in the epilogue.
        tc_ref[...] = tc_ref[...] + jnp.sum(eq, axis=2)                 # (B, C)
        pc_ref[...] = pc_ref[...] + jnp.sum(logits, axis=2)             # (B, C)
        in_ref[...] = in_ref[...] + jnp.sum(eq * logits, axis=2)        # (B, C)

        # ---------- cross-entropy partial sums ----------
        # CE numerator = sum_t valid*lse  -  sum_{b,c} in_ref  (algebraic reuse of
        # the dice intersection accumulator; no eq*(lse - logits) product needed).
        m = jnp.max(logits, axis=1)                                      # (B, T)
        lse = jnp.log(jnp.sum(jnp.exp(logits - m[:, None, :]), axis=1)) + m
        valid = jnp.logical_and(labels >= 0, labels < C).astype(jnp.float32)
        celse_ref[...] = celse_ref[...] + jnp.sum(valid * lse, axis=1, keepdims=True)
        valid_ref[...] = valid_ref[...] + jnp.sum(valid, axis=1, keepdims=True)

        # ---------- remap-correction partials (skipped on the common path) ----------
        @pl.when(scalars_ref[0] == 1)
        def _remap():
            rmask = (labels == ignore_index).astype(jnp.float32)         # (B, T)
            rcnt_ref[...] = rcnt_ref[...] + jnp.sum(rmask, axis=1, keepdims=True)
            rlgt_ref[...] = rlgt_ref[...] + jnp.sum(rmask[:, None, :] * logits, axis=2)

    return kernel


def ce_gdice_loss(logits_nchw, labels_nhw, max_tile_lanes=None):
    B, C, H, W = logits_nchw.shape
    N = H * W

    logits = logits_nchw.reshape(B, C, N)                  # keep caller dtype
    labels = labels_nhw.reshape(B, N).astype(jnp.int32)

    # Global remap decision (labels-only pass, hoisted out of the kernel).
    lmin = jnp.min(labels)
    lmax = jnp.max(labels)
    do_remap = jnp.logical_not(
        jnp.logical_and(lmin <= IGNORE_INDEX, IGNORE_INDEX < lmax))
    scalars = do_remap.astype(jnp.int32).reshape(1)

    # ---------------- tile sizing (VMEM-budget & sublane-padding aware) ------------
    itemsize = jnp.dtype(logits.dtype).itemsize
    sublane = {4: 8, 2: 16, 1: 32}.get(itemsize, 8)
    c_pad = _round_up(C, sublane)          # real sublane-padded (C, TILE) footprint
    b_pad = _round_up(B, 8)

    try:
        vmem_cap = int(pltpu.get_tpu_info().vmem_capacity_bytes)
    except Exception:
        vmem_cap = 64 * 1024 * 1024        # v7x-safe fallback
    if vmem_cap <= 0:
        vmem_cap = 64 * 1024 * 1024
    budget = min(int(vmem_cap * 0.55), 80 * 1024 * 1024)

    logits_bpl = B * c_pad * itemsize      # logits bytes per lane, per buffer
    labels_bpl = b_pad * 4                 # labels bytes per lane, per buffer
    stream_bpl = 2 * (logits_bpl + labels_bpl)   # double-buffered input streams

    target_block = 8 * 1024 * 1024         # ~HBM-roofline-saturating block size
    tile = min(target_block // max(logits_bpl, 1), budget // stream_bpl)
    tile = max(128, (tile // 128) * 128)
    if max_tile_lanes is not None:
        tile = max(128, min(tile, (max_tile_lanes // 128) * 128))
    tile = min(tile, _round_up(N, 128))

    n_total = _cdiv(N, tile)
    num_slices = 2 if n_total >= 2 else 1   # leading "parallel" axis (v7x megacore)
    n_inner = _cdiv(n_total, num_slices)
    n_pad = tile * num_slices * n_inner

    if n_pad != N:
        logits = jnp.pad(logits, ((0, 0), (0, 0), (0, n_pad - N)))
        # Sentinel -1: never matches a class, never IGNORE -> contributes nothing.
        labels = jnp.pad(labels, ((0, 0), (0, n_pad - N)), constant_values=-1)

    vmem_limit = int(min(vmem_cap, max(stream_bpl * tile + (16 << 20), 32 << 20)))

    kernel = _make_kernel(B, C, IGNORE_INDEX)

    bc = jax.ShapeDtypeStruct((num_slices, B, C), jnp.float32)
    b1 = jax.ShapeDtypeStruct((num_slices, B, 1), jnp.float32)
    bc_spec = pl.BlockSpec((1, B, C), lambda p, n, s: (p, 0, 0))
    b1_spec = pl.BlockSpec((1, B, 1), lambda p, n, s: (p, 0, 0))

    outs = pl.pallas_call(
        kernel,
        out_shape=(bc, bc, bc, bc, b1, b1, b1),
        grid_spec=pltpu.PrefetchScalarGridSpec(
            num_scalar_prefetch=1,
            grid=(num_slices, n_inner),
            in_specs=[
                pl.BlockSpec((B, C, tile), lambda p, n, s: (0, 0, p * n_inner + n)),
                pl.BlockSpec((B, tile), lambda p, n, s: (0, p * n_inner + n)),
            ],
            out_specs=(bc_spec, bc_spec, bc_spec, bc_spec,
                       b1_spec, b1_spec, b1_spec),
        ),
        compiler_params=pltpu.CompilerParams(
            dimension_semantics=("parallel", "arbitrary"),
            vmem_limit_bytes=vmem_limit),
    )(scalars, logits, labels)

    tc_p, pc_p, in_p, rlgt_p, celse_p, valid_p, rcnt_p = outs

    # ---------------- tiny scalar epilogue (plain JAX) ----------------
    sum_tc = jnp.sum(tc_p, axis=0)                 # (B, C)  one-hot counts
    sum_pc = jnp.sum(pc_p, axis=0)                 # (B, C)  sum of logits
    inter_eq = jnp.sum(in_p, axis=0)               # (B, C)  sum eq * logits
    rlgt = jnp.sum(rlgt_p, axis=0)                 # (B, C)  sum over ignored pixels
    celse = jnp.sum(celse_p, axis=0)[:, 0]         # (B,)
    valid = jnp.sum(valid_p, axis=0)[:, 0]         # (B,)
    rcnt = jnp.sum(rcnt_p, axis=0)[:, 0]           # (B,)

    # Cross entropy with ignore_index (mean over valid pixels).
    ce = (jnp.sum(celse) - jnp.sum(inter_eq)) / jnp.sum(valid)

    # Apply the ignore->labels.min() remap correction to the dice target sums.
    # NOTE: labels outside [0, C-1] other than IGNORE are undefined behavior in the
    # reference module (scatter / CE would fail); they are simply dropped here.
    lmin_c = jnp.clip(lmin, 0, C - 1)
    is_lmin = (jnp.arange(C) == lmin_c).astype(jnp.float32)      # (C,)
    stc = sum_tc + is_lmin[None, :] * rcnt[:, None]
    sin = inter_eq + rlgt * is_lmin[None, :]

    w = 1.0 / (stc + EPS) ** 2
    intersection = w * sin
    union = w * (sum_pc + stc)
    divided = 1.0 - 2.0 * (jnp.sum(intersection, axis=1) + EPS) / (
        jnp.sum(union, axis=1) + EPS)
    dice = jnp.mean(divided)

    return CE_WEIGHT * ce + DICE_WEIGHT * dice


def ce_gdice_loss_reference(logits_nchw, labels_nhw):
    """Pure-JAX reference mirroring the PyTorch module, for validation."""
    B, C, H, W = logits_nchw.shape
    logits = logits_nchw.astype(jnp.float32)
    labels = labels_nhw.astype(jnp.int32)

    # cross entropy with ignore_index
    logp = jax.nn.log_softmax(logits, axis=1)
    valid = labels != IGNORE_INDEX
    safe_labels = jnp.clip(labels, 0, C - 1)
    picked = jnp.take_along_axis(logp, safe_labels[:, None, :, :], axis=1)[:, 0]
    ce = -jnp.sum(picked * valid) / jnp.sum(valid)

    # generalized dice (on raw logits, as in the reference module)
    lmin, lmax = labels.min(), labels.max()
    do_remap = jnp.logical_not((lmin <= IGNORE_INDEX) & (IGNORE_INDEX < lmax))
    dl = jnp.where(do_remap & (labels == IGNORE_INDEX), lmin, labels)
    tc = jax.nn.one_hot(dl, C, axis=1, dtype=jnp.float32)
    sum_tc = jnp.sum(tc, axis=(2, 3))
    sum_pc = jnp.sum(logits, axis=(2, 3))
    inter = jnp.sum(logits * tc, axis=(2, 3))
    w = 1.0 / (sum_tc + EPS) ** 2
    intersection = w * inter
    union = w * (sum_pc + sum_tc)
    divided = 1.0 - 2.0 * (jnp.sum(intersection, axis=1) + EPS) / (
        jnp.sum(union, axis=1) + EPS)
    dice = jnp.mean(divided)
    return CE_WEIGHT * ce + DICE_WEIGHT * dice


if __name__ == "__main__":
    key = jax.random.PRNGKey(0)
    k1, k2, k3, k4 = jax.random.split(key, 4)

    # Case 1: labels all in-range, N = 1024 (single big tile).
    B, C, H, W = 2, 4, 32, 32
    logits1 = jax.random.normal(k1, (B, C, H, W), dtype=jnp.float32)
    labels1 = jax.random.randint(k2, (B, H, W), 0, C, dtype=jnp.int32)

    # Case 2: ignore pixels (remap path) + spatial size not a multiple of 128.
    B2, C2, H2, W2 = 2, 4, 18, 18
    logits2 = jax.random.normal(k3, (B2, C2, H2, W2), dtype=jnp.float32)
    labels2 = jax.random.randint(k4, (B2, H2, W2), 0, C2, dtype=jnp.int32)
    labels2 = labels2.at[:, :2, :].set(IGNORE_INDEX)

    cases = [
        (logits1, labels1, None),   # single tile, no remap
        (logits2, labels2, None),   # single tile, tail padding + remap
        (logits1, labels1, 128),    # multi-tile grid + 2-slice parallel axis
        (logits2, labels2, 128),    # multi-tile + tail padding + remap correction
    ]
    for lg, lb, cap in cases:
        loss = ce_gdice_loss(lg, lb, max_tile_lanes=cap)
        jax.block_until_ready(loss)
        ref = ce_gdice_loss_reference(lg, lb)
        jax.block_until_ready(ref)
        assert jnp.allclose(loss, ref, rtol=1e-4, atol=1e-4), (cap, loss, ref)

    print("KERNEL_OK")
</pallas_src>

<mosaic_0001>
module attributes {stable_mosaic.version = 11 : i64} {
  func.func @kernel(%arg0: i32, %arg1: i32, %arg2: memref<1xi32, #tpu.memory_space<smem>>, %arg3: memref<2x4x1024xf32, #tpu.memory_space<vmem>>, %arg4: memref<2x1024xi32, #tpu.memory_space<vmem>>, %arg5: memref<1x2x4xf32, #tpu.memory_space<vmem>>, %arg6: memref<1x2x4xf32, #tpu.memory_space<vmem>>, %arg7: memref<1x2x4xf32, #tpu.memory_space<vmem>>, %arg8: memref<1x2x4xf32, #tpu.memory_space<vmem>>, %arg9: memref<1x2x1xf32, #tpu.memory_space<vmem>>, %arg10: memref<1x2x1xf32, #tpu.memory_space<vmem>>, %arg11: memref<1x2x1xf32, #tpu.memory_space<vmem>>) attributes {dimension_semantics = [#tpu.dimension_semantics<parallel>, #tpu.dimension_semantics<arbitrary>], iteration_bounds = array<i64: 1, 1>, scalar_prefetch = 1 : i64, scratch_operands = 0 : i64, tpu.core_type = #tpu.core_type<tc>, window_params = [{transform_indices = @transform_0, window_bounds = array<i64: 2, 4, 1024>}, {transform_indices = @transform_1, window_bounds = array<i64: 2, 1024>}, {transform_indices = @transform_2, window_bounds = array<i64: 1, 2, 4>}, {transform_indices = @transform_3, window_bounds = array<i64: 1, 2, 4>}, {transform_indices = @transform_4, window_bounds = array<i64: 1, 2, 4>}, {transform_indices = @transform_5, window_bounds = array<i64: 1, 2, 4>}, {transform_indices = @transform_6, window_bounds = array<i64: 1, 2, 1>}, {transform_indices = @transform_7, window_bounds = array<i64: 1, 2, 1>}, {transform_indices = @transform_8, window_bounds = array<i64: 1, 2, 1>}]} {
    %c0_i32 = arith.constant 0 : i32
    %0 = arith.cmpi eq, %arg1, %c0_i32 : i32
    %1 = arith.extui %0 : i1 to i32
    %c0_i32_0 = arith.constant 0 : i32
    %2 = arith.cmpi ne, %1, %c0_i32_0 : i32
    scf.if %2 {
      %cst_44 = arith.constant 0.000000e+00 : f32
      %60 = vector.broadcast %cst_44 : f32 to vector<1x2x4xf32>
      %c0_45 = arith.constant 0 : index
      %c0_46 = arith.constant 0 : index
      %c0_47 = arith.constant 0 : index
      %61 = vector.load %arg5[%c0_45, %c0_46, %c0_47] : memref<1x2x4xf32, #tpu.memory_space<vmem>>, vector<1x2x4xf32>
      tpu.vector_store %arg5[%c0_45, %c0_46, %c0_47], %60 {strides = array<i32>} : memref<1x2x4xf32, #tpu.memory_space<vmem>>, vector<1x2x4xf32>,
      %cst_48 = arith.constant 0.000000e+00 : f32
      %62 = vector.broadcast %cst_48 : f32 to vector<1x2x4xf32>
      %c0_49 = arith.constant 0 : index
      %c0_50 = arith.constant 0 : index
      %c0_51 = arith.constant 0 : index
      %63 = vector.load %arg6[%c0_49, %c0_50, %c0_51] : memref<1x2x4xf32, #tpu.memory_space<vmem>>, vector<1x2x4xf32>
      tpu.vector_store %arg6[%c0_49, %c0_50, %c0_51], %62 {strides = array<i32>} : memref<1x2x4xf32, #tpu.memory_space<vmem>>, vector<1x2x4xf32>,
      %cst_52 = arith.constant 0.000000e+00 : f32
      %64 = vector.broadcast %cst_52 : f32 to vector<1x2x4xf32>
      %c0_53 = arith.constant 0 : index
      %c0_54 = arith.constant 0 : index
      %c0_55 = arith.constant 0 : index
      %65 = vector.load %arg7[%c0_53, %c0_54, %c0_55] : memref<1x2x4xf32, #tpu.memory_space<vmem>>, vector<1x2x4xf32>
      tpu.vector_store %arg7[%c0_53, %c0_54, %c0_55], %64 {strides = array<i32>} : memref<1x2x4xf32, #tpu.memory_space<vmem>>, vector<1x2x4xf32>,
      %cst_56 = arith.constant 0.000000e+00 : f32
      %66 = vector.broadcast %cst_56 : f32 to vector<1x2x4xf32>
      %c0_57 = arith.constant 0 : index
      %c0_58 = arith.constant 0 : index
      %c0_59 = arith.constant 0 : index
      %67 = vector.load %arg8[%c0_57, %c0_58, %c0_59] : memref<1x2x4xf32, #tpu.memory_space<vmem>>, vector<1x2x4xf32>
      tpu.vector_store %arg8[%c0_57, %c0_58, %c0_59], %66 {strides = array<i32>} : memref<1x2x4xf32, #tpu.memory_space<vmem>>, vector<1x2x4xf32>,
      %cst_60 = arith.constant 0.000000e+00 : f32
      %68 = vector.broadcast %cst_60 : f32 to vector<1x2x1xf32>
      %c0_61 = arith.constant 0 : index
      %c0_62 = arith.constant 0 : index
      %c0_63 = arith.constant 0 : index
      %69 = vector.load %arg9[%c0_61, %c0_62, %c0_63] : memref<1x2x1xf32, #tpu.memory_space<vmem>>, vector<1x2x1xf32>
      tpu.vector_store %arg9[%c0_61, %c0_62, %c0_63], %68 {strides = array<i32>} : memref<1x2x1xf32, #tpu.memory_space<vmem>>, vector<1x2x1xf32>,
      %cst_64 = arith.constant 0.000000e+00 : f32
      %70 = vector.broadcast %cst_64 : f32 to vector<1x2x1xf32>
      %c0_65 = arith.constant 0 : index
      %c0_66 = arith.constant 0 : index
      %c0_67 = arith.constant 0 : index
      %71 = vector.load %arg10[%c0_65, %c0_66, %c0_67] : memref<1x2x1xf32, #tpu.memory_space<vmem>>, vector<1x2x1xf32>
      tpu.vector_store %arg10[%c0_65, %c0_66, %c0_67], %70 {strides = array<i32>} : memref<1x2x1xf32, #tpu.memory_space<vmem>>, vector<1x2x1xf32>,
      %cst_68 = arith.constant 0.000000e+00 : f32
      %72 = vector.broadcast %cst_68 : f32 to vector<1x2x1xf32>
      %c0_69 = arith.constant 0 : index
      %c0_70 = arith.constant 0 : index
      %c0_71 = arith.constant 0 : index
      %73 = vector.load %arg11[%c0_69, %c0_70, %c0_71] : memref<1x2x1xf32, #tpu.memory_space<vmem>>, vector<1x2x1xf32>
      tpu.vector_store %arg11[%c0_69, %c0_70, %c0_71], %72 {strides = array<i32>} : memref<1x2x1xf32, #tpu.memory_space<vmem>>, vector<1x2x1xf32>,
    } else {
    }
    %c0 = arith.constant 0 : index
    %c0_1 = arith.constant 0 : index
    %c0_2 = arith.constant 0 : index
    %3 = vector.load %arg3[%c0, %c0_1, %c0_2] : memref<2x4x1024xf32, #tpu.memory_space<vmem>>, vector<2x4x1024xf32>
    %c0_3 = arith.constant 0 : index
    %c0_4 = arith.constant 0 : index
    %4 = vector.load %arg4[%c0_3, %c0_4] : memref<2x1024xi32, #tpu.memory_space<vmem>>, vector<2x1024xi32>
    %5 = tpu.iota {dimensions = array<i32: 1>} : vector<1x4x1xi32>
    %6 = vector.shape_cast %4 : vector<2x1024xi32> to vector<2x1x1024xi32>
    %7 = vector.broadcast %5 : vector<1x4x1xi32> to vector<2x4x1024xi32>
    %8 = vector.broadcast %6 : vector<2x1x1024xi32> to vector<2x4x1024xi32>
    %9 = arith.cmpi eq, %7, %8 : vector<2x4x1024xi32>
    %10 = arith.extui %9 : vector<2x4x1024xi1> to vector<2x4x1024xi32>
    %11 = arith.sitofp %10 : vector<2x4x1024xi32> to vector<2x4x1024xf32>
    %c0_5 = arith.constant 0 : index
    %c0_6 = arith.constant 0 : index
    %c0_7 = arith.constant 0 : index
    %12 = vector.load %arg5[%c0_5, %c0_6, %c0_7] : memref<1x2x4xf32, #tpu.memory_space<vmem>>, vector<1x2x4xf32>
    %cst = arith.constant dense<0.000000e+00> : vector<2x4xf32>
    %13 = vector.multi_reduction <add>, %11, %cst [2] : vector<2x4x1024xf32> to vector<2x4xf32>
    %14 = vector.shape_cast %13 : vector<2x4xf32> to vector<1x2x4xf32>
    %15 = arith.addf %12, %14 : vector<1x2x4xf32>
    %c0_8 = arith.constant 0 : index
    %c0_9 = arith.constant 0 : index
    %c0_10 = arith.constant 0 : index
    %16 = vector.load %arg5[%c0_8, %c0_9, %c0_10] : memref<1x2x4xf32, #tpu.memory_space<vmem>>, vector<1x2x4xf32>
    tpu.vector_store %arg5[%c0_8, %c0_9, %c0_10], %15 {strides = array<i32>} : memref<1x2x4xf32, #tpu.memory_space<vmem>>, vector<1x2x4xf32>,
    %c0_11 = arith.constant 0 : index
    %c0_12 = arith.constant 0 : index
    %c0_13 = arith.constant 0 : index
    %17 = vector.load %arg6[%c0_11, %c0_12, %c0_13] : memref<1x2x4xf32, #tpu.memory_space<vmem>>, vector<1x2x4xf32>
    %cst_14 = arith.constant dense<0.000000e+00> : vector<2x4xf32>
    %18 = vector.multi_reduction <add>, %3, %cst_14 [2] : vector<2x4x1024xf32> to vector<2x4xf32>
    %19 = vector.shape_cast %18 : vector<2x4xf32> to vector<1x2x4xf32>
    %20 = arith.addf %17, %19 : vector<1x2x4xf32>
    %c0_15 = arith.constant 0 : index
    %c0_16 = arith.constant 0 : index
    %c0_17 = arith.constant 0 : index
    %21 = vector.load %arg6[%c0_15, %c0_16, %c0_17] : memref<1x2x4xf32, #tpu.memory_space<vmem>>, vector<1x2x4xf32>
    tpu.vector_store %arg6[%c0_15, %c0_16, %c0_17], %20 {strides = array<i32>} : memref<1x2x4xf32, #tpu.memory_space<vmem>>, vector<1x2x4xf32>,
    %c0_18 = arith.constant 0 : index
    %c0_19 = arith.constant 0 : index
    %c0_20 = arith.constant 0 : index
    %22 = vector.load %arg7[%c0_18, %c0_19, %c0_20] : memref<1x2x4xf32, #tpu.memory_space<vmem>>, vector<1x2x4xf32>
    %23 = arith.mulf %11, %3 : vector<2x4x1024xf32>
    %cst_21 = arith.constant dense<0.000000e+00> : vector<2x4xf32>
    %24 = vector.multi_reduction <add>, %23, %cst_21 [2] : vector<2x4x1024xf32> to vector<2x4xf32>
    %25 = vector.shape_cast %24 : vector<2x4xf32> to vector<1x2x4xf32>
    %26 = arith.addf %22, %25 : vector<1x2x4xf32>
    %c0_22 = arith.constant 0 : index
    %c0_23 = arith.constant 0 : index
    %c0_24 = arith.constant 0 : index
    %27 = vector.load %arg7[%c0_22, %c0_23, %c0_24] : memref<1x2x4xf32, #tpu.memory_space<vmem>>, vector<1x2x4xf32>
    tpu.vector_store %arg7[%c0_22, %c0_23, %c0_24], %26 {strides = array<i32>} : memref<1x2x4xf32, #tpu.memory_space<vmem>>, vector<1x2x4xf32>,
    %cst_25 = arith.constant dense<0xFF800000> : vector<2x1024xf32>
    %28 = vector.multi_reduction <maximumf>, %3, %cst_25 [1] : vector<2x4x1024xf32> to vector<2x1024xf32>
    %29 = vector.shape_cast %28 : vector<2x1024xf32> to vector<2x1x1024xf32>
    %30 = vector.broadcast %29 : vector<2x1x1024xf32> to vector<2x4x1024xf32>
    %31 = arith.subf %3, %30 : vector<2x4x1024xf32>
    %32 = math.exp %31 : vector<2x4x1024xf32>
    %cst_26 = arith.constant dense<0.000000e+00> : vector<2x1024xf32>
    %33 = vector.multi_reduction <add>, %32, %cst_26 [1] : vector<2x4x1024xf32> to vector<2x1024xf32>
    %34 = math.log %33 : vector<2x1024xf32>
    %35 = arith.addf %34, %28 : vector<2x1024xf32>
    %c0_i32_27 = arith.constant 0 : i32
    %36 = vector.broadcast %c0_i32_27 : i32 to vector<2x1024xi32>
    %37 = arith.cmpi sge, %4, %36 : vector<2x1024xi32>
    %c4_i32 = arith.constant 4 : i32
    %38 = vector.broadcast %c4_i32 : i32 to vector<2x1024xi32>
    %39 = arith.cmpi slt, %4, %38 : vector<2x1024xi32>
    %40 = arith.andi %37, %39 : vector<2x1024xi1>
    %41 = arith.extui %40 : vector<2x1024xi1> to vector<2x1024xi32>
    %42 = arith.sitofp %41 : vector<2x1024xi32> to vector<2x1024xf32>
    %c0_28 = arith.constant 0 : index
    %c0_29 = arith.constant 0 : index
    %c0_30 = arith.constant 0 : index
    %43 = vector.load %arg9[%c0_28, %c0_29, %c0_30] : memref<1x2x1xf32, #tpu.memory_space<vmem>>, vector<1x2x1xf32>
    %44 = arith.mulf %42, %35 : vector<2x1024xf32>
    %cst_31 = arith.constant dense<0.000000e+00> : vector<2xf32>
    %45 = vector.multi_reduction <add>, %44, %cst_31 [1] : vector<2x1024xf32> to vector<2xf32>
    %46 = vector.shape_cast %45 : vector<2xf32> to vector<2x1xf32>
    %47 = vector.shape_cast %46 : vector<2x1xf32> to vector<1x2x1xf32>
    %48 = arith.addf %43, %47 : vector<1x2x1xf32>
    %c0_32 = arith.constant 0 : index
    %c0_33 = arith.constant 0 : index
    %c0_34 = arith.constant 0 : index
    %49 = vector.load %arg9[%c0_32, %c0_33, %c0_34] : memref<1x2x1xf32, #tpu.memory_space<vmem>>, vector<1x2x1xf32>
    tpu.vector_store %arg9[%c0_32, %c0_33, %c0_34], %48 {strides = array<i32>} : memref<1x2x1xf32, #tpu.memory_space<vmem>>, vector<1x2x1xf32>,
    %c0_35 = arith.constant 0 : index
    %c0_36 = arith.constant 0 : index
    %c0_37 = arith.constant 0 : index
    %50 = vector.load %arg10[%c0_35, %c0_36, %c0_37] : memref<1x2x1xf32, #tpu.memory_space<vmem>>, vector<1x2x1xf32>
    %cst_38 = arith.constant dense<0.000000e+00> : vector<2xf32>
    %51 = vector.multi_reduction <add>, %42, %cst_38 [1] : vector<2x1024xf32> to vector<2xf32>
    %52 = vector.shape_cast %51 : vector<2xf32> to vector<2x1xf32>
    %53 = vector.shape_cast %52 : vector<2x1xf32> to vector<1x2x1xf32>
    %54 = arith.addf %50, %53 : vector<1x2x1xf32>
    %c0_39 = arith.constant 0 : index
    %c0_40 = arith.constant 0 : index
    %c0_41 = arith.constant 0 : index
    %55 = vector.load %arg10[%c0_39, %c0_40, %c0_41] : memref<1x2x1xf32, #tpu.memory_space<vmem>>, vector<1x2x1xf32>
    tpu.vector_store %arg10[%c0_39, %c0_40, %c0_41], %54 {strides = array<i32>} : memref<1x2x1xf32, #tpu.memory_space<vmem>>, vector<1x2x1xf32>,
    %c0_42 = arith.constant 0 : index
    %56 = memref.load %arg2[%c0_42] : memref<1xi32, #tpu.memory_space<smem>>
    %c1_i32 = arith.constant 1 : i32
    %57 = arith.cmpi eq, %56, %c1_i32 : i32
    %58 = arith.extui %57 : i1 to i32
    %c0_i32_43 = arith.constant 0 : i32
    %59 = arith.cmpi ne, %58, %c0_i32_43 : i32
    scf.if %59 {
      %c255_i32 = arith.constant 255 : i32
      %60 = vector.broadcast %c255_i32 : i32 to vector<2x1024xi32>
      %61 = arith.cmpi eq, %4, %60 : vector<2x1024xi32>
      %62 = arith.extui %61 : vector<2x1024xi1> to vector<2x1024xi32>
      %63 = arith.sitofp %62 : vector<2x1024xi32> to vector<2x1024xf32>
      %c0_44 = arith.constant 0 : index
      %c0_45 = arith.constant 0 : index
      %c0_46 = arith.constant 0 : index
      %64 = vector.load %arg11[%c0_44, %c0_45, %c0_46] : memref<1x2x1xf32, #tpu.memory_space<vmem>>, vector<1x2x1xf32>
      %cst_47 = arith.constant dense<0.000000e+00> : vector<2xf32>
      %65 = vector.multi_reduction <add>, %63, %cst_47 [1] : vector<2x1024xf32> to vector<2xf32>
      %66 = vector.shape_cast %65 : vector<2xf32> to vector<2x1xf32>
      %67 = vector.shape_cast %66 : vector<2x1xf32> to vector<1x2x1xf32>
      %68 = arith.addf %64, %67 : vector<1x2x1xf32>
      %c0_48 = arith.constant 0 : index
      %c0_49 = arith.constant 0 : index
      %c0_50 = arith.constant 0 : index
      %69 = vector.load %arg11[%c0_48, %c0_49, %c0_50] : memref<1x2x1xf32, #tpu.memory_space<vmem>>, vector<1x2x1xf32>
      tpu.vector_store %arg11[%c0_48, %c0_49, %c0_50], %68 {strides = array<i32>} : memref<1x2x1xf32, #tpu.memory_space<vmem>>, vector<1x2x1xf32>,
      %c0_51 = arith.constant 0 : index
      %c0_52 = arith.constant 0 : index
      %c0_53 = arith.constant 0 : index
      %70 = vector.load %arg8[%c0_51, %c0_52, %c0_53] : memref<1x2x4xf32, #tpu.memory_space<vmem>>, vector<1x2x4xf32>
      %71 = vector.shape_cast %63 : vector<2x1024xf32> to vector<2x1x1024xf32>
      %72 = vector.broadcast %71 : vector<2x1x1024xf32> to vector<2x4x1024xf32>
      %73 = arith.mulf %72, %3 : vector<2x4x1024xf32>
      %cst_54 = arith.constant dense<0.000000e+00> : vector<2x4xf32>
      %74 = vector.multi_reduction <add>, %73, %cst_54 [2] : vector<2x4x1024xf32> to vector<2x4xf32>
      %75 = vector.shape_cast %74 : vector<2x4xf32> to vector<1x2x4xf32>
      %76 = arith.addf %70, %75 : vector<1x2x4xf32>
      %c0_55 = arith.constant 0 : index
      %c0_56 = arith.constant 0 : index
      %c0_57 = arith.constant 0 : index
      %77 = vector.load %arg8[%c0_55, %c0_56, %c0_57] : memref<1x2x4xf32, #tpu.memory_space<vmem>>, vector<1x2x4xf32>
      tpu.vector_store %arg8[%c0_55, %c0_56, %c0_57], %76 {strides = array<i32>} : memref<1x2x4xf32, #tpu.memory_space<vmem>>, vector<1x2x4xf32>,
    } else {
    }
    return
  }
  func.func @transform_0(%arg0: i32, %arg1: i32, %arg2: memref<1xi32, #tpu.memory_space<smem>>) -> (i32, i32, i32) {
    %c1_i32 = arith.constant 1 : i32
    %0 = arith.muli %arg0, %c1_i32 : i32
    %1 = arith.addi %0, %arg1 : i32
    %c0_i32 = arith.constant 0 : i32
    %c0_i32_0 = arith.constant 0 : i32
    %c0_i32_1 = arith.constant 0 : i32
    return %c0_i32, %c0_i32_0, %1 : i32, i32, i32
  }
  func.func @transform_1(%arg0: i32, %arg1: i32, %arg2: memref<1xi32, #tpu.memory_space<smem>>) -> (i32, i32) {
    %c1_i32 = arith.constant 1 : i32
    %0 = arith.muli %arg0, %c1_i32 : i32
    %1 = arith.addi %0, %arg1 : i32
    %c0_i32 = arith.constant 0 : i32
    %c0_i32_0 = arith.constant 0 : i32
    return %c0_i32, %1 : i32, i32
  }
  func.func @transform_2(%arg0: i32, %arg1: i32, %arg2: memref<1xi32, #tpu.memory_space<smem>>) -> (i32, i32, i32) {
    %c0_i32 = arith.constant 0 : i32
    %c0_i32_0 = arith.constant 0 : i32
    %c0_i32_1 = arith.constant 0 : i32
    return %arg0, %c0_i32, %c0_i32_0 : i32, i32, i32
  }
  func.func @transform_3(%arg0: i32, %arg1: i32, %arg2: memref<1xi32, #tpu.memory_space<smem>>) -> (i32, i32, i32) {
    %c0_i32 = arith.constant 0 : i32
    %c0_i32_0 = arith.constant 0 : i32
    %c0_i32_1 = arith.constant 0 : i32
    return %arg0, %c0_i32, %c0_i32_0 : i32, i32, i32
  }
  func.func @transform_4(%arg0: i32, %arg1: i32, %arg2: memref<1xi32, #tpu.memory_space<smem>>) -> (i32, i32, i32) {
    %c0_i32 = arith.constant 0 : i32
    %c0_i32_0 = arith.constant 0 : i32
    %c0_i32_1 = arith.constant 0 : i32
    return %arg0, %c0_i32, %c0_i32_0 : i32, i32, i32
  }
  func.func @transform_5(%arg0: i32, %arg1: i32, %arg2: memref<1xi32, #tpu.memory_space<smem>>) -> (i32, i32, i32) {
    %c0_i32 = arith.constant 0 : i32
    %c0_i32_0 = arith.constant 0 : i32
    %c0_i32_1 = arith.constant 0 : i32
    return %arg0, %c0_i32, %c0_i32_0 : i32, i32, i32
  }
  func.func @transform_6(%arg0: i32, %arg1: i32, %arg2: memref<1xi32, #tpu.memory_space<smem>>) -> (i32, i32, i32) {
    %c0_i32 = arith.constant 0 : i32
    %c0_i32_0 = arith.constant 0 : i32
    %c0_i32_1 = arith.constant 0 : i32
    return %arg0, %c0_i32, %c0_i32_0 : i32, i32, i32
  }
  func.func @transform_7(%arg0: i32, %arg1: i32, %arg2: memref<1xi32, #tpu.memory_space<smem>>) -> (i32, i32, i32) {
    %c0_i32 = arith.constant 0 : i32
    %c0_i32_0 = arith.constant 0 : i32
    %c0_i32_1 = arith.constant 0 : i32
    return %arg0, %c0_i32, %c0_i32_0 : i32, i32, i32
  }
  func.func @transform_8(%arg0: i32, %arg1: i32, %arg2: memref<1xi32, #tpu.memory_space<smem>>) -> (i32, i32, i32) {
    %c0_i32 = arith.constant 0 : i32
    %c0_i32_0 = arith.constant 0 : i32
    %c0_i32_1 = arith.constant 0 : i32
    return %arg0, %c0_i32, %c0_i32_0 : i32, i32, i32
  }
}

</mosaic_0001>

<llo_original>
// kernel: tpu_custom_call.1
$region0: #{tpu_custom_call.1}
  #allocation0 [shape = 'u32[]', space=smem, size = 0x4, offset = 0x4, fixed_abs, tag = 'smem constant byte address 0x4 - core index']
  #allocation1 [shape = 'u32[144,128]{1,0:T(1,128)}', space=vmem, size = 0x12000, scoped, tag = 'internal scratch']
  #allocation2 [shape = 's32[1]{0}', space=sflag, size = 0x4, scoped, tag = 'scoped memory for tpu_custom_call.1']
  #allocation3 [shape = 's32[1]{0:T(128)S(6)}', space=smem, size = 0x200, scoped, tag = 'prefetched SMEM operand 0']
  %s0 = inlined_call_operand.<no memory space> [shape: s32[1], index: 0, kind: input, shape index: {}]
  %s1 = inlined_call_operand.hbm [shape: f32[2,4,1024], index: 1, kind: input, shape index: {}]
  %s2 = inlined_call_operand.hbm [shape: s32[2,1024], index: 2, kind: input, shape index: {}]
  %s3 = inlined_call_operand.hbm [shape: f32[1,2,4], index: 3, kind: output, shape index: {0}]
  %s4 = inlined_call_operand.hbm [shape: f32[1,2,4], index: 4, kind: output, shape index: {1}]
  %s5 = inlined_call_operand.hbm [shape: f32[1,2,4], index: 5, kind: output, shape index: {2}]
  %s6 = inlined_call_operand.hbm [shape: f32[1,2,4], index: 6, kind: output, shape index: {3}]
  %s7 = inlined_call_operand.vmem [shape: f32[1,2,1], index: 7, kind: output, shape index: {4}]
  %s8 = inlined_call_operand.vmem [shape: f32[1,2,1], index: 8, kind: output, shape index: {5}]
  %s9 = inlined_call_operand.vmem [shape: f32[1,2,1], index: 9, kind: output, shape index: {6}]
  %10 = xla_tuple %s3, %s4, %s5, %s6, %s7, %s8, %s9
  %s11 = sld [smem:[#allocation0]]
  $region82: #{tpu_custom_call.1} parent=0
    _
  %s13 = ssub.s32 1, %s11
  %s14 = scalar_select 0, %s13, %s11
  %15 = sst [smem:[#allocation3]] %s0
  $region1: #{tpu_custom_call.1} parent=0
    #allocation4 [shape = 'u8[32768]{0}', space=vmem, size = 0x8000, scoped, tag = 'input window, operand 1, single buffered']
    #allocation5 [shape = 's32[1]{0}', space=sflag, size = 0x4, scoped, tag = 'scoped memory for tpu_custom_call.1']
    #allocation6 [shape = 's32[1]{0}', space=sflag, size = 0x4, scoped, tag = 'scoped memory for tpu_custom_call.1']
    #allocation7 [shape = 'u8[8192]{0}', space=vmem, size = 0x2000, scoped, tag = 'input window, operand 2, single buffered']
    #allocation8 [shape = 's32[1]{0}', space=sflag, size = 0x4, scoped, tag = 'scoped memory for tpu_custom_call.1']
    #allocation9 [shape = 'u8[1024]{0}', space=vmem, size = 0x400, scoped, tag = 'output window, operand 0, single buffered']
    #allocation10 [shape = 'u8[1024]{0}', space=vmem, size = 0x400, scoped, tag = 'output window, operand 1, single buffered']
    #allocation11 [shape = 's32[1]{0}', space=sflag, size = 0x4, scoped, tag = 'scoped memory for tpu_custom_call.1']
    #allocation12 [shape = 'u8[1024]{0}', space=vmem, size = 0x400, scoped, tag = 'output window, operand 2, single buffered']
    #allocation13 [shape = 'u8[1024]{0}', space=vmem, size = 0x400, scoped, tag = 'output window, operand 3, single buffered']
    #allocation14 [shape = 's32[1]{0}', space=sflag, size = 0x4, scoped, tag = 'scoped memory for tpu_custom_call.1']
    %16 = vsyncpa [#allocation5], 0
    %17 = vsyncpa [#allocation8], 0
    %18 = vsyncpa [#allocation6], 0
    %19 = vsyncpa [#allocation11], 0
    %20 = vsyncpa [#allocation14], 0
    // Predicated region
    $region2: #{tpu_custom_call.1} parent=1 // pred_check
      _
    $region3: #{tpu_custom_call.1} parent=1 // pred_check_branch
      %22 = sbr.rel (0) target = $region5
    $region4: #{tpu_custom_call.1} parent=1 // pred_region
      %s23 = sadd.s32 0, 0
      %s24 = smul.u32 8, %s23
      %s26 = ssub.s32 1024, 1024
      %27 = vsyncadd [#allocation5], %s26
      %s28 = smul.addr %s24, 64
      %s29 = scalar_lea.hbm %s1, %s28
      %s30 = sshll.u32 [#allocation4], 4
      %s31 = int_to_ptr.vmem [resolvable:$true] %s30
      %36 = dma.hbm_to_vmem [thread:$0]  %s29, 1024, %s31, [#allocation5], 512, 512, 32
    $region5: #{tpu_custom_call.1} parent=1 // pred_fallthru
      _
    // Predicated region
    $region6: #{tpu_custom_call.1} parent=1 // pred_check
      _
    $region7: #{tpu_custom_call.1} parent=1 // pred_check_branch
      %38 = sbr.rel (0) target = $region9
    $region8: #{tpu_custom_call.1} parent=1 // pred_region
      %s39 = sadd.s32 0, 0
      %s40 = smul.u32 8, %s39
      %s42 = ssub.s32 256, 256
      %43 = vsyncadd [#allocation8], %s42
      %s44 = smul.addr %s40, 32
      %s45 = scalar_lea.hbm %s2, %s44
      %s47 = sshll.u32 [#allocation7], 4
      %s48 = int_to_ptr.vmem [resolvable:$true] %s47
      %50 = dma.hbm_to_vmem [thread:$0]  %s45, 256, %s48, [#allocation8]
    $region9: #{tpu_custom_call.1} parent=1 // pred_fallthru
      _
    // Predicated region
    $region10: #{tpu_custom_call.1} parent=1 // pred_check
      _
    $region11: #{tpu_custom_call.1} parent=1 // pred_check_branch
      %52 = sbr.rel (0) target = $region13
    $region12: #{tpu_custom_call.1} parent=1 // pred_region
      %53 = dma.done [#allocation5], 1024
    $region13: #{tpu_custom_call.1} parent=1 // pred_fallthru
      _
    // Predicated region
    $region14: #{tpu_custom_call.1} parent=1 // pred_check
      _
    $region15: #{tpu_custom_call.1} parent=1 // pred_check_branch
      %55 = sbr.rel (0) target = $region17
    $region16: #{tpu_custom_call.1} parent=1 // pred_region
      %56 = dma.done [#allocation8], 256
    $region17: #{tpu_custom_call.1} parent=1 // pred_fallthru
      _
    %s57 = sadd.s32 0, 0
    %s58 = smul.u32 8, %s57
    %s59 = sadd.s32 0, 0
    %s60 = smul.u32 8, %s59
    %p61 = scmp.eq.s32.totalorder 0, 0
    // Predicated region
    $region18: #{tpu_custom_call.1} parent=1 // pred_check
      %p62 = pneg %p61
    $region19: #{tpu_custom_call.1} parent=1 // pred_check_branch
      %64 = sbr.rel (%p62) target = $region21
    $region20: #{tpu_custom_call.1} parent=1 // pred_region
      %vm65 = vcmask 25600
      %66 = vst.msk [vmem:[#allocation9] sm:$0x3] %vm65, 0.0
      %67 = vst.msk [vmem:[#allocation10] sm:$0x3] %vm65, 0.0
      %68 = vst.msk [vmem:[#allocation12] sm:$0x3] %vm65, 0.0
      %69 = vst.msk [vmem:[#allocation13] sm:$0x3] %vm65, 0.0
      %vm70 = vcmask 1024
      %71 = vst.msk [vmem:[%s7] sm:$0x3] %vm70, 0.0
      %72 = vst.msk [vmem:[%s8] sm:$0x3] %vm70, 0.0
      %73 = vst.msk [vmem:[%s9] sm:$0x3] %vm70, 0.0
    $region21: #{tpu_custom_call.1} parent=1 // pred_fallthru
      _
    %v74 = vld [vmem:[#allocation4] sm:$0xff]
    %v75 = vld [vmem:[#allocation4 + $0x8] sm:$0xff]
    %v76 = vld [vmem:[#allocation4 + $0x10] sm:$0xff]
    %v77 = vld [vmem:[#allocation4 + $0x18] sm:$0xff]
    %v78 = vld [vmem:[#allocation4 + $0x20] sm:$0xff]
    %v79 = vld [vmem:[#allocation4 + $0x28] sm:$0xff]
    %v80 = vld [vmem:[#allocation4 + $0x30] sm:$0xff]
    %v81 = vld [vmem:[#allocation4 + $0x38] sm:$0xff]
    %v82 = vld [vmem:[#allocation7] sm:$0xff]
    %v83 = vld [vmem:[#allocation7 + $0x8] sm:$0xff]
    %v84 = vlaneseq
    %v85 = vshrl.u32 %v84, 7
    %v87 = vunpack.c.l.s4 1966171168
    %v88 = vunpack.c.0.s8 %v87
    %v89 = vlaneseq
    %v90 = vshrl.u32 %v89, 7
    %v91 = vsub.s32 %v88, %v90
    %v92 = vrot.slane %v82, %v91
    %v94 = vunpack.c.l.s4 1966171168
    %v95 = vunpack.c.0.s8 %v94
    %v96 = vlaneseq
    %v97 = vshrl.u32 %v96, 7
    %v98 = vsub.s32 %v95, %v97
    %v99 = vrot.slane %v83, %v98
    %v100 = vcombine.low %v92, %v99
    %v101 = vcombine.high %v92, %v99
    %v102 = vlaneseq
    %v103 = vshrl.u32 %v102, 7
    %v104 = vsub.s32 0, %v103
    %v105 = vrot.slane %v100, %v104
    %v106 = vlaneseq
    %v107 = vshrl.u32 %v106, 7
    %v108 = vsub.s32 1, %v107
    %v109 = vrot.slane %v100, %v108
    %v110 = vlaneseq
    %v111 = vshrl.u32 %v110, 7
    %v112 = vsub.s32 2, %v111
    %v113 = vrot.slane %v100, %v112
    %v114 = vlaneseq
    %v115 = vshrl.u32 %v114, 7
    %v116 = vsub.s32 3, %v115
    %v117 = vrot.slane %v100, %v116
    %v118 = vlaneseq
    %v119 = vshrl.u32 %v118, 7
    %v120 = vsub.s32 4, %v119
    %v121 = vrot.slane %v100, %v120
    %v122 = vlaneseq
    %v123 = vshrl.u32 %v122, 7
    %v124 = vsub.s32 5, %v123
    %v125 = vrot.slane %v100, %v124
    %v126 = vlaneseq
    %v127 = vshrl.u32 %v126, 7
    %v128 = vsub.s32 6, %v127
    %v129 = vrot.slane %v100, %v128
    %v130 = vlaneseq
    %v131 = vshrl.u32 %v130, 7
    %v132 = vsub.s32 7, %v131
    %v133 = vrot.slane %v100, %v132
    %v134 = vlaneseq
    %v135 = vshrl.u32 %v134, 7
    %v136 = vsub.s32 0, %v135
    %v137 = vrot.slane %v101, %v136
    %v138 = vlaneseq
    %v139 = vshrl.u32 %v138, 7
    %v140 = vsub.s32 1, %v139
    %v141 = vrot.slane %v101, %v140
    %v142 = vlaneseq
    %v143 = vshrl.u32 %v142, 7
    %v144 = vsub.s32 2, %v143
    %v145 = vrot.slane %v101, %v144
    %v146 = vlaneseq
    %v147 = vshrl.u32 %v146, 7
    %v148 = vsub.s32 3, %v147
    %v149 = vrot.slane %v101, %v148
    %v150 = vlaneseq
    %v151 = vshrl.u32 %v150, 7
    %v152 = vsub.s32 4, %v151
    %v153 = vrot.slane %v101, %v152
    %v154 = vlaneseq
    %v155 = vshrl.u32 %v154, 7
    %v156 = vsub.s32 5, %v155
    %v157 = vrot.slane %v101, %v156
    %v158 = vlaneseq
    %v159 = vshrl.u32 %v158, 7
    %v160 = vsub.s32 6, %v159
    %v161 = vrot.slane %v101, %v160
    %v162 = vlaneseq
    %v163 = vshrl.u32 %v162, 7
    %v164 = vsub.s32 7, %v163
    %v165 = vrot.slane %v101, %v164
    %vm166 = vcmp.eq.s32.totalorder %v85, %v105
    %vm167 = vcmp.eq.s32.totalorder %v85, %v109
    %vm168 = vcmp.eq.s32.totalorder %v85, %v113
    %vm169 = vcmp.eq.s32.totalorder %v85, %v117
    %vm170 = vcmp.eq.s32.totalorder %v85, %v121
    %vm171 = vcmp.eq.s32.totalorder %v85, %v125
    %vm172 = vcmp.eq.s32.totalorder %v85, %v129
    %vm173 = vcmp.eq.s32.totalorder %v85, %v133
    %vm174 = vcmp.eq.s32.totalorder %v85, %v137
    %vm175 = vcmp.eq.s32.totalorder %v85, %v141
    %vm176 = vcmp.eq.s32.totalorder %v85, %v145
    %vm177 = vcmp.eq.s32.totalorder %v85, %v149
    %vm178 = vcmp.eq.s32.totalorder %v85, %v153
    %vm179 = vcmp.eq.s32.totalorder %v85, %v157
    %vm180 = vcmp.eq.s32.totalorder %v85, %v161
    %vm181 = vcmp.eq.s32.totalorder %v85, %v165
    %v182 = vsel %vm166, 1, 0
    %v183 = vsel %vm167, 1, 0
    %v184 = vsel %vm168, 1, 0
    %v185 = vsel %vm169, 1, 0
    %v186 = vsel %vm170, 1, 0
    %v187 = vsel %vm171, 1, 0
    %v188 = vsel %vm172, 1, 0
    %v189 = vsel %vm173, 1, 0
    %v190 = vsel %vm174, 1, 0
    %v191 = vsel %vm175, 1, 0
    %v192 = vsel %vm176, 1, 0
    %v193 = vsel %vm177, 1, 0
    %v194 = vsel %vm178, 1, 0
    %v195 = vsel %vm179, 1, 0
    %v196 = vsel %vm180, 1, 0
    %v197 = vsel %vm181, 1, 0
    %v198 = vcvt.s32.f32 %v182
    %v199 = vcvt.s32.f32 %v183
    %v200 = vcvt.s32.f32 %v184
    %v201 = vcvt.s32.f32 %v185
    %v202 = vcvt.s32.f32 %v186
    %v203 = vcvt.s32.f32 %v187
    %v204 = vcvt.s32.f32 %v188
    %v205 = vcvt.s32.f32 %v189
    %v206 = vcvt.s32.f32 %v190
    %v207 = vcvt.s32.f32 %v191
    %v208 = vcvt.s32.f32 %v192
    %v209 = vcvt.s32.f32 %v193
    %v210 = vcvt.s32.f32 %v194
    %v211 = vcvt.s32.f32 %v195
    %v212 = vcvt.s32.f32 %v196
    %v213 = vcvt.s32.f32 %v197
    %v214 = vld [vmem:[#allocation9] sm:$0x3]
    %vm215 = vcmask 1043456
    %v216 = vsel %vm215, %v198, 0.0
    %v217 = vsel %vm215, %v199, 0.0
    %v218 = vadd.f32 %v216, %v217
    %v219 = vsel %vm215, %v200, 0.0
    %v220 = vadd.f32 %v218, %v219
    %v221 = vsel %vm215, %v201, 0.0
    %v222 = vadd.f32 %v220, %v221
    %v223 = vsel %vm215, %v202, 0.0
    %v224 = vadd.f32 %v222, %v223
    %v225 = vsel %vm215, %v203, 0.0
    %v226 = vadd.f32 %v224, %v225
    %v227 = vsel %vm215, %v204, 0.0
    %v228 = vadd.f32 %v226, %v227
    %v229 = vsel %vm215, %v205, 0.0
    %v230 = vadd.f32 %v228, %v229
    %231 = vadd.xlane.f32.xlu0 %v230
    %v232 = vpop.xlane.xlu0 %231
    %v233 = vsel %vm215, %v206, 0.0
    %v234 = vsel %vm215, %v207, 0.0
    %v235 = vadd.f32 %v233, %v234
    %v236 = vsel %vm215, %v208, 0.0
    %v237 = vadd.f32 %v235, %v236
    %v238 = vsel %vm215, %v209, 0.0
    %v239 = vadd.f32 %v237, %v238
    %v240 = vsel %vm215, %v210, 0.0
    %v241 = vadd.f32 %v239, %v240
    %v242 = vsel %vm215, %v211, 0.0
    %v243 = vadd.f32 %v241, %v242
    %v244 = vsel %vm215, %v212, 0.0
    %v245 = vadd.f32 %v243, %v244
    %v246 = vsel %vm215, %v213, 0.0
    %v247 = vadd.f32 %v245, %v246
    %248 = vadd.xlane.f32.xlu0 %v247
    %v249 = vpop.xlane.xlu0 %248
    %v252 = vlaneseq
    %v253 = vand.u32 %v252, 127
    %v254 = vlaneseq
    %v255 = vshrl.u32 %v254, 7
    %v256 = vsub.s32 %v253, %v255
    %v257 = vrot.slane %v232, %v256
    %v258 = vlaneseq
    %v259 = vshrl.u32 %v258, 7
    %v260 = vsub.s32 %v253, %v259
    %v261 = vrot.slane %v249, %v260
    %vm262 = vcmask 1041409
    %v263 = vsel %vm262, %v261, %v257
    %v265 = vadd.f32 %v214, %v263
    %vm266 = vcmask 25600
    %267 = vst.msk [vmem:[#allocation9] sm:$0x3] %vm266, %v265
    %v268 = vld [vmem:[#allocation10] sm:$0x3]
    %v277 = vcombine.high %v74, %v74
    %v278 = vcombine.high %v75, %v75
    %v279 = vcombine.high %v76, %v76
    %v280 = vcombine.high %v77, %v77
    %v281 = vcombine.high %v78, %v78
    %v282 = vcombine.high %v79, %v79
    %v283 = vcombine.high %v80, %v80
    %v284 = vcombine.high %v81, %v81
    %v293 = vsel %vm215, %v74, 0.0
    %v294 = vsel %vm215, %v277, 0.0
    %v295 = vadd.f32 %v293, %v294
    %v296 = vsel %vm215, %v75, 0.0
    %v297 = vadd.f32 %v295, %v296
    %v298 = vsel %vm215, %v278, 0.0
    %v299 = vadd.f32 %v297, %v298
    %v300 = vsel %vm215, %v76, 0.0
    %v301 = vadd.f32 %v299, %v300
    %v302 = vsel %vm215, %v279, 0.0
    %v303 = vadd.f32 %v301, %v302
    %v304 = vsel %vm215, %v77, 0.0
    %v305 = vadd.f32 %v303, %v304
    %v306 = vsel %vm215, %v280, 0.0
    %v307 = vadd.f32 %v305, %v306
    %308 = vadd.xlane.f32.xlu0 %v307
    %v309 = vpop.xlane.xlu0 %308
    %v310 = vsel %vm215, %v78, 0.0
    %v311 = vsel %vm215, %v281, 0.0
    %v312 = vadd.f32 %v310, %v311
    %v313 = vsel %vm215, %v79, 0.0
    %v314 = vadd.f32 %v312, %v313
    %v315 = vsel %vm215, %v282, 0.0
    %v316 = vadd.f32 %v314, %v315
    %v317 = vsel %vm215, %v80, 0.0
    %v318 = vadd.f32 %v316, %v317
    %v319 = vsel %vm215, %v283, 0.0
    %v320 = vadd.f32 %v318, %v319
    %v321 = vsel %vm215, %v81, 0.0
    %v322 = vadd.f32 %v320, %v321
    %v323 = vsel %vm215, %v284, 0.0
    %v324 = vadd.f32 %v322, %v323
    %325 = vadd.xlane.f32.xlu0 %v324
    %v326 = vpop.xlane.xlu0 %325
    %v329 = vlaneseq
    %v330 = vshrl.u32 %v329, 7
    %v331 = vsub.s32 %v253, %v330
    %v332 = vrot.slane %v309, %v331
    %v333 = vlaneseq
    %v334 = vshrl.u32 %v333, 7
    %v335 = vsub.s32 %v253, %v334
    %v336 = vrot.slane %v326, %v335
    %v337 = vsel %vm262, %v336, %v332
    %v339 = vadd.f32 %v268, %v337
    %340 = vst.msk [vmem:[#allocation10] sm:$0x3] %vm266, %v339
    %v341 = vld [vmem:[#allocation12] sm:$0x3]
    %v342 = vmul.f32 %v198, %v74
    %v343 = vmul.f32 %v199, %v277
    %v344 = vmul.f32 %v200, %v75
    %v345 = vmul.f32 %v201, %v278
    %v346 = vmul.f32 %v202, %v76
    %v347 = vmul.f32 %v203, %v279
    %v348 = vmul.f32 %v204, %v77
    %v349 = vmul.f32 %v205, %v280
    %v350 = vmul.f32 %v206, %v78
    %v351 = vmul.f32 %v207, %v281
    %v352 = vmul.f32 %v208, %v79
    %v353 = vmul.f32 %v209, %v282
    %v354 = vmul.f32 %v210, %v80
    %v355 = vmul.f32 %v211, %v283
    %v356 = vmul.f32 %v212, %v81
    %v357 = vmul.f32 %v213, %v284
    %v358 = vsel %vm215, %v342, 0.0
    %v359 = vsel %vm215, %v343, 0.0
    %v360 = vadd.f32 %v358, %v359
    %v361 = vsel %vm215, %v344, 0.0
    %v362 = vadd.f32 %v360, %v361
    %v363 = vsel %vm215, %v345, 0.0
    %v364 = vadd.f32 %v362, %v363
    %v365 = vsel %vm215, %v346, 0.0
    %v366 = vadd.f32 %v364, %v365
    %v367 = vsel %vm215, %v347, 0.0
    %v368 = vadd.f32 %v366, %v367
    %v369 = vsel %vm215, %v348, 0.0
    %v370 = vadd.f32 %v368, %v369
    %v371 = vsel %vm215, %v349, 0.0
    %v372 = vadd.f32 %v370, %v371
    %373 = vadd.xlane.f32.xlu0 %v372
    %v374 = vpop.xlane.xlu0 %373
    %v375 = vsel %vm215, %v350, 0.0
    %v376 = vsel %vm215, %v351, 0.0
    %v377 = vadd.f32 %v375, %v376
    %v378 = vsel %vm215, %v352, 0.0
    %v379 = vadd.f32 %v377, %v378
    %v380 = vsel %vm215, %v353, 0.0
    %v381 = vadd.f32 %v379, %v380
    %v382 = vsel %vm215, %v354, 0.0
    %v383 = vadd.f32 %v381, %v382
    %v384 = vsel %vm215, %v355, 0.0
    %v385 = vadd.f32 %v383, %v384
    %v386 = vsel %vm215, %v356, 0.0
    %v387 = vadd.f32 %v385, %v386
    %v388 = vsel %vm215, %v357, 0.0
    %v389 = vadd.f32 %v387, %v388
    %390 = vadd.xlane.f32.xlu0 %v389
    %v391 = vpop.xlane.xlu0 %390
    %v394 = vlaneseq
    %v395 = vshrl.u32 %v394, 7
    %v396 = vsub.s32 %v253, %v395
    %v397 = vrot.slane %v374, %v396
    %v398 = vlaneseq
    %v399 = vshrl.u32 %v398, 7
    %v400 = vsub.s32 %v253, %v399
    %v401 = vrot.slane %v391, %v400
    %v402 = vsel %vm262, %v401, %v397
    %v404 = vadd.f32 %v341, %v402
    %405 = vst.msk [vmem:[#allocation12] sm:$0x3] %vm266, %v404
    %v406 = vsel %vm215, %v74, -inf
    %v407 = vrot.slane %v406, 4
    %v408 = vmax.f32 %v406, %v407
    %v409 = vrot.slane %v408, 2
    %v410 = vmax.f32 %v408, %v409
    %v411 = vrot.slane %v410, 1
    %v412 = vmax.f32 %v410, %v411
    %v413 = vsel %vm215, %v277, -inf
    %v414 = vrot.slane %v413, 4
    %v415 = vmax.f32 %v413, %v414
    %v416 = vrot.slane %v415, 2
    %v417 = vmax.f32 %v415, %v416
    %v418 = vrot.slane %v417, 1
    %v419 = vmax.f32 %v417, %v418
    %v420 = vsel %vm215, %v75, -inf
    %v421 = vrot.slane %v420, 4
    %v422 = vmax.f32 %v420, %v421
    %v423 = vrot.slane %v422, 2
    %v424 = vmax.f32 %v422, %v423
    %v425 = vrot.slane %v424, 1
    %v426 = vmax.f32 %v424, %v425
    %v427 = vsel %vm215, %v278, -inf
    %v428 = vrot.slane %v427, 4
    %v429 = vmax.f32 %v427, %v428
    %v430 = vrot.slane %v429, 2
    %v431 = vmax.f32 %v429, %v430
    %v432 = vrot.slane %v431, 1
    %v433 = vmax.f32 %v431, %v432
    %v434 = vsel %vm215, %v76, -inf
    %v435 = vrot.slane %v434, 4
    %v436 = vmax.f32 %v434, %v435
    %v437 = vrot.slane %v436, 2
    %v438 = vmax.f32 %v436, %v437
    %v439 = vrot.slane %v438, 1
    %v440 = vmax.f32 %v438, %v439
    %v441 = vsel %vm215, %v279, -inf
    %v442 = vrot.slane %v441, 4
    %v443 = vmax.f32 %v441, %v442
    %v444 = vrot.slane %v443, 2
    %v445 = vmax.f32 %v443, %v444
    %v446 = vrot.slane %v445, 1
    %v447 = vmax.f32 %v445, %v446
    %v448 = vsel %vm215, %v77, -inf
    %v449 = vrot.slane %v448, 4
    %v450 = vmax.f32 %v448, %v449
    %v451 = vrot.slane %v450, 2
    %v452 = vmax.f32 %v450, %v451
    %v453 = vrot.slane %v452, 1
    %v454 = vmax.f32 %v452, %v453
    %v455 = vsel %vm215, %v280, -inf
    %v456 = vrot.slane %v455, 4
    %v457 = vmax.f32 %v455, %v456
    %v458 = vrot.slane %v457, 2
    %v459 = vmax.f32 %v457, %v458
    %v460 = vrot.slane %v459, 1
    %v461 = vmax.f32 %v459, %v460
    %v462 = vsel %vm215, %v78, -inf
    %v463 = vrot.slane %v462, 4
    %v464 = vmax.f32 %v462, %v463
    %v465 = vrot.slane %v464, 2
    %v466 = vmax.f32 %v464, %v465
    %v467 = vrot.slane %v466, 1
    %v468 = vmax.f32 %v466, %v467
    %v469 = vsel %vm215, %v281, -inf
    %v470 = vrot.slane %v469, 4
    %v471 = vmax.f32 %v469, %v470
    %v472 = vrot.slane %v471, 2
    %v473 = vmax.f32 %v471, %v472
    %v474 = vrot.slane %v473, 1
    %v475 = vmax.f32 %v473, %v474
    %v476 = vsel %vm215, %v79, -inf
    %v477 = vrot.slane %v476, 4
    %v478 = vmax.f32 %v476, %v477
    %v479 = vrot.slane %v478, 2
    %v480 = vmax.f32 %v478, %v479
    %v481 = vrot.slane %v480, 1
    %v482 = vmax.f32 %v480, %v481
    %v483 = vsel %vm215, %v282, -inf
    %v484 = vrot.slane %v483, 4
    %v485 = vmax.f32 %v483, %v484
    %v486 = vrot.slane %v485, 2
    %v487 = vmax.f32 %v485, %v486
    %v488 = vrot.slane %v487, 1
    %v489 = vmax.f32 %v487, %v488
    %v490 = vsel %vm215, %v80, -inf
    %v491 = vrot.slane %v490, 4
    %v492 = vmax.f32 %v490, %v491
    %v493 = vrot.slane %v492, 2
    %v494 = vmax.f32 %v492, %v493
    %v495 = vrot.slane %v494, 1
    %v496 = vmax.f32 %v494, %v495
    %v497 = vsel %vm215, %v283, -inf
    %v498 = vrot.slane %v497, 4
    %v499 = vmax.f32 %v497, %v498
    %v500 = vrot.slane %v499, 2
    %v501 = vmax.f32 %v499, %v500
    %v502 = vrot.slane %v501, 1
    %v503 = vmax.f32 %v501, %v502
    %v504 = vsel %vm215, %v81, -inf
    %v505 = vrot.slane %v504, 4
    %v506 = vmax.f32 %v504, %v505
    %v507 = vrot.slane %v506, 2
    %v508 = vmax.f32 %v506, %v507
    %v509 = vrot.slane %v508, 1
    %v510 = vmax.f32 %v508, %v509
    %v511 = vsel %vm215, %v284, -inf
    %v512 = vrot.slane %v511, 4
    %v513 = vmax.f32 %v511, %v512
    %v514 = vrot.slane %v513, 2
    %v515 = vmax.f32 %v513, %v514
    %v516 = vrot.slane %v515, 1
    %v517 = vmax.f32 %v515, %v516
    %v534 = vcombine.low %v412, %v419
    %v535 = vcombine.low %v426, %v433
    %v536 = vcombine.low %v440, %v447
    %v537 = vcombine.low %v454, %v461
    %v538 = vcombine.low %v468, %v475
    %v539 = vcombine.low %v482, %v489
    %v540 = vcombine.low %v496, %v503
    %v541 = vcombine.low %v510, %v517
    %v550 = vsub.f32 %v74, %v534
    %v551 = vsub.f32 %v75, %v535
    %v552 = vsub.f32 %v76, %v536
    %v553 = vsub.f32 %v77, %v537
    %v554 = vsub.f32 %v78, %v538
    %v555 = vsub.f32 %v79, %v539
    %v556 = vsub.f32 %v80, %v540
    %v557 = vsub.f32 %v81, %v541
    %v558 = vmul.f32 %v550, 1.442695
    %v559 = vpow.pop %v558
    %v560 = vmul.f32 %v551, 1.442695
    %v561 = vpow.pop %v560
    %v562 = vmul.f32 %v552, 1.442695
    %v563 = vpow.pop %v562
    %v564 = vmul.f32 %v553, 1.442695
    %v565 = vpow.pop %v564
    %v566 = vmul.f32 %v554, 1.442695
    %v567 = vpow.pop %v566
    %v568 = vmul.f32 %v555, 1.442695
    %v569 = vpow.pop %v568
    %v570 = vmul.f32 %v556, 1.442695
    %v571 = vpow.pop %v570
    %v572 = vmul.f32 %v557, 1.442695
    %v573 = vpow.pop %v572
    %v582 = vcombine.high %v559, %v559
    %v583 = vcombine.high %v561, %v561
    %v584 = vcombine.high %v563, %v563
    %v585 = vcombine.high %v565, %v565
    %v586 = vcombine.high %v567, %v567
    %v587 = vcombine.high %v569, %v569
    %v588 = vcombine.high %v571, %v571
    %v589 = vcombine.high %v573, %v573
    %v598 = vsel %vm215, %v559, 0.0
    %v599 = vrot.slane %v598, 4
    %v600 = vadd.f32 %v598, %v599
    %v601 = vrot.slane %v600, 2
    %v602 = vadd.f32 %v600, %v601
    %v603 = vrot.slane %v602, 1
    %v604 = vadd.f32 %v602, %v603
    %v605 = vsel %vm215, %v582, 0.0
    %v606 = vrot.slane %v605, 4
    %v607 = vadd.f32 %v605, %v606
    %v608 = vrot.slane %v607, 2
    %v609 = vadd.f32 %v607, %v608
    %v610 = vrot.slane %v609, 1
    %v611 = vadd.f32 %v609, %v610
    %v612 = vsel %vm215, %v561, 0.0
    %v613 = vrot.slane %v612, 4
    %v614 = vadd.f32 %v612, %v613
    %v615 = vrot.slane %v614, 2
    %v616 = vadd.f32 %v614, %v615
    %v617 = vrot.slane %v616, 1
    %v618 = vadd.f32 %v616, %v617
    %v619 = vsel %vm215, %v583, 0.0
    %v620 = vrot.slane %v619, 4
    %v621 = vadd.f32 %v619, %v620
    %v622 = vrot.slane %v621, 2
    %v623 = vadd.f32 %v621, %v622
    %v624 = vrot.slane %v623, 1
    %v625 = vadd.f32 %v623, %v624
    %v626 = vsel %vm215, %v563, 0.0
    %v627 = vrot.slane %v626, 4
    %v628 = vadd.f32 %v626, %v627
    %v629 = vrot.slane %v628, 2
    %v630 = vadd.f32 %v628, %v629
    %v631 = vrot.slane %v630, 1
    %v632 = vadd.f32 %v630, %v631
    %v633 = vsel %vm215, %v584, 0.0
    %v634 = vrot.slane %v633, 4
    %v635 = vadd.f32 %v633, %v634
    %v636 = vrot.slane %v635, 2
    %v637 = vadd.f32 %v635, %v636
    %v638 = vrot.slane %v637, 1
    %v639 = vadd.f32 %v637, %v638
    %v640 = vsel %vm215, %v565, 0.0
    %v641 = vrot.slane %v640, 4
    %v642 = vadd.f32 %v640, %v641
    %v643 = vrot.slane %v642, 2
    %v644 = vadd.f32 %v642, %v643
    %v645 = vrot.slane %v644, 1
    %v646 = vadd.f32 %v644, %v645
    %v647 = vsel %vm215, %v585, 0.0
    %v648 = vrot.slane %v647, 4
    %v649 = vadd.f32 %v647, %v648
    %v650 = vrot.slane %v649, 2
    %v651 = vadd.f32 %v649, %v650
    %v652 = vrot.slane %v651, 1
    %v653 = vadd.f32 %v651, %v652
    %v654 = vsel %vm215, %v567, 0.0
    %v655 = vrot.slane %v654, 4
    %v656 = vadd.f32 %v654, %v655
    %v657 = vrot.slane %v656, 2
    %v658 = vadd.f32 %v656, %v657
    %v659 = vrot.slane %v658, 1
    %v660 = vadd.f32 %v658, %v659
    %v661 = vsel %vm215, %v586, 0.0
    %v662 = vrot.slane %v661, 4
    %v663 = vadd.f32 %v661, %v662
    %v664 = vrot.slane %v663, 2
    %v665 = vadd.f32 %v663, %v664
    %v666 = vrot.slane %v665, 1
    %v667 = vadd.f32 %v665, %v666
    %v668 = vsel %vm215, %v569, 0.0
    %v669 = vrot.slane %v668, 4
    %v670 = vadd.f32 %v668, %v669
    %v671 = vrot.slane %v670, 2
    %v672 = vadd.f32 %v670, %v671
    %v673 = vrot.slane %v672, 1
    %v674 = vadd.f32 %v672, %v673
    %v675 = vsel %vm215, %v587, 0.0
    %v676 = vrot.slane %v675, 4
    %v677 = vadd.f32 %v675, %v676
    %v678 = vrot.slane %v677, 2
    %v679 = vadd.f32 %v677, %v678
    %v680 = vrot.slane %v679, 1
    %v681 = vadd.f32 %v679, %v680
    %v682 = vsel %vm215, %v571, 0.0
    %v683 = vrot.slane %v682, 4
    %v684 = vadd.f32 %v682, %v683
    %v685 = vrot.slane %v684, 2
    %v686 = vadd.f32 %v684, %v685
    %v687 = vrot.slane %v686, 1
    %v688 = vadd.f32 %v686, %v687
    %v689 = vsel %vm215, %v588, 0.0
    %v690 = vrot.slane %v689, 4
    %v691 = vadd.f32 %v689, %v690
    %v692 = vrot.slane %v691, 2
    %v693 = vadd.f32 %v691, %v692
    %v694 = vrot.slane %v693, 1
    %v695 = vadd.f32 %v693, %v694
    %v696 = vsel %vm215, %v573, 0.0
    %v697 = vrot.slane %v696, 4
    %v698 = vadd.f32 %v696, %v697
    %v699 = vrot.slane %v698, 2
    %v700 = vadd.f32 %v698, %v699
    %v701 = vrot.slane %v700, 1
    %v702 = vadd.f32 %v700, %v701
    %v703 = vsel %vm215, %v589, 0.0
    %v704 = vrot.slane %v703, 4
    %v705 = vadd.f32 %v703, %v704
    %v706 = vrot.slane %v705, 2
    %v707 = vadd.f32 %v705, %v706
    %v708 = vrot.slane %v707, 1
    %v709 = vadd.f32 %v707, %v708
    %v710 = vlog2.pop %v604
    %v711 = vmul.f32 %v710, 0.6931472
    %v712 = vlog2.pop %v611
    %v713 = vmul.f32 %v712, 0.6931472
    %v714 = vlog2.pop %v618
    %v715 = vmul.f32 %v714, 0.6931472
    %v716 = vlog2.pop %v625
    %v717 = vmul.f32 %v716, 0.6931472
    %v718 = vlog2.pop %v632
    %v719 = vmul.f32 %v718, 0.6931472
    %v720 = vlog2.pop %v639
    %v721 = vmul.f32 %v720, 0.6931472
    %v722 = vlog2.pop %v646
    %v723 = vmul.f32 %v722, 0.6931472
    %v724 = vlog2.pop %v653
    %v725 = vmul.f32 %v724, 0.6931472
    %v726 = vlog2.pop %v660
    %v727 = vmul.f32 %v726, 0.6931472
    %v728 = vlog2.pop %v667
    %v729 = vmul.f32 %v728, 0.6931472
    %v730 = vlog2.pop %v674
    %v731 = vmul.f32 %v730, 0.6931472
    %v732 = vlog2.pop %v681
    %v733 = vmul.f32 %v732, 0.6931472
    %v734 = vlog2.pop %v688
    %v735 = vmul.f32 %v734, 0.6931472
    %v736 = vlog2.pop %v695
    %v737 = vmul.f32 %v736, 0.6931472
    %v738 = vlog2.pop %v702
    %v739 = vmul.f32 %v738, 0.6931472
    %v740 = vlog2.pop %v709
    %v741 = vmul.f32 %v740, 0.6931472
    %v742 = vadd.f32 %v711, %v412
    %v743 = vadd.f32 %v713, %v419
    %v744 = vadd.f32 %v715, %v426
    %v745 = vadd.f32 %v717, %v433
    %v746 = vadd.f32 %v719, %v440
    %v747 = vadd.f32 %v721, %v447
    %v748 = vadd.f32 %v723, %v454
    %v749 = vadd.f32 %v725, %v461
    %v750 = vadd.f32 %v727, %v468
    %v751 = vadd.f32 %v729, %v475
    %v752 = vadd.f32 %v731, %v482
    %v753 = vadd.f32 %v733, %v489
    %v754 = vadd.f32 %v735, %v496
    %v755 = vadd.f32 %v737, %v503
    %v756 = vadd.f32 %v739, %v510
    %v757 = vadd.f32 %v741, %v517
    %vm758 = vcmp.ge.s32.totalorder %v82, 0
    %vm759 = vcmp.ge.s32.totalorder %v83, 0
    %vm760 = vcmp.lt.s32.totalorder %v82, 4
    %vm761 = vcmp.lt.s32.totalorder %v83, 4
    %vm762 = vmand %vm758, %vm760
    %vm763 = vmand %vm759, %vm761
    %v764 = vsel %vm762, 1, 0
    %v765 = vsel %vm763, 1, 0
    %v766 = vcvt.s32.f32 %v764
    %v767 = vcvt.s32.f32 %v765
    %v768 = vld [vmem:[%s7] sm:$0x3]
    %v785 = vcombine.low %v742, %v743
    %v786 = vcombine.low %v744, %v745
    %v788 = vunpack.c.l.s4 1983009808
    %v789 = vunpack.c.0.s8 %v788
    %v790 = vlaneseq
    %v791 = vshrl.u32 %v790, 7
    %v792 = vsub.s32 %v789, %v791
    %v793 = vrot.slane %v785, %v792
    %v795 = vunpack.c.l.s4 1983009808
    %v796 = vunpack.c.0.s8 %v795
    %v797 = vlaneseq
    %v798 = vshrl.u32 %v797, 7
    %v799 = vsub.s32 %v796, %v798
    %v800 = vrot.slane %v786, %v799
    %v801 = vcombine.low %v793, %v800
    %v802 = vcombine.low %v746, %v747
    %v803 = vcombine.low %v748, %v749
    %v805 = vunpack.c.l.s4 1983009808
    %v806 = vunpack.c.0.s8 %v805
    %v807 = vlaneseq
    %v808 = vshrl.u32 %v807, 7
    %v809 = vsub.s32 %v806, %v808
    %v810 = vrot.slane %v802, %v809
    %v812 = vunpack.c.l.s4 1983009808
    %v813 = vunpack.c.0.s8 %v812
    %v814 = vlaneseq
    %v815 = vshrl.u32 %v814, 7
    %v816 = vsub.s32 %v813, %v815
    %v817 = vrot.slane %v803, %v816
    %v818 = vcombine.low %v810, %v817
    %v819 = vcombine.low %v750, %v751
    %v820 = vcombine.low %v752, %v753
    %v822 = vunpack.c.l.s4 1983009808
    %v823 = vunpack.c.0.s8 %v822
    %v824 = vlaneseq
    %v825 = vshrl.u32 %v824, 7
    %v826 = vsub.s32 %v823, %v825
    %v827 = vrot.slane %v819, %v826
    %v829 = vunpack.c.l.s4 1983009808
    %v830 = vunpack.c.0.s8 %v829
    %v831 = vlaneseq
    %v832 = vshrl.u32 %v831, 7
    %v833 = vsub.s32 %v830, %v832
    %v834 = vrot.slane %v820, %v833
    %v835 = vcombine.low %v827, %v834
    %v836 = vcombine.low %v754, %v755
    %v837 = vcombine.low %v756, %v757
    %v839 = vunpack.c.l.s4 1983009808
    %v840 = vunpack.c.0.s8 %v839
    %v841 = vlaneseq
    %v842 = vshrl.u32 %v841, 7
    %v843 = vsub.s32 %v840, %v842
    %v844 = vrot.slane %v836, %v843
    %v846 = vunpack.c.l.s4 1983009808
    %v847 = vunpack.c.0.s8 %v846
    %v848 = vlaneseq
    %v849 = vshrl.u32 %v848, 7
    %v850 = vsub.s32 %v847, %v849
    %v851 = vrot.slane %v837, %v850
    %v852 = vcombine.low %v844, %v851
    %vm853 = vcmask 1044484
    %v854 = vsel %vm853, %v801, %v801
    %vm855 = vcmask 1046534
    %v856 = vsel %vm855, %v801, %v854
    %v857 = vrot.slane %v835, 7
    %v858 = vsel %vm262, %v857, %v856
    %vm859 = vcmask 1043459
    %v860 = vsel %vm859, %v857, %v858
    %vm861 = vcmask 1045509
    %v862 = vsel %vm861, %v857, %v860
    %vm863 = vcmask 1047559
    %v864 = vsel %vm863, %v857, %v862
    %v865 = vsel %vm853, %v818, %v818
    %v866 = vsel %vm855, %v818, %v865
    %v867 = vrot.slane %v852, 7
    %v868 = vsel %vm262, %v867, %v866
    %v869 = vsel %vm859, %v867, %v868
    %v870 = vsel %vm861, %v867, %v869
    %v871 = vsel %vm863, %v867, %v870
    %v874 = vmul.f32 %v766, %v864
    %v875 = vmul.f32 %v767, %v871
    %v878 = vcombine.high %v874, %v874
    %v880 = vunpack.c.l.s4 1983009808
    %v881 = vunpack.c.0.s8 %v880
    %v882 = vlaneseq
    %v883 = vshrl.u32 %v882, 7
    %v884 = vsub.s32 %v881, %v883
    %v885 = vrot.slane %v874, %v884
    %v887 = vunpack.c.l.s4 1983009808
    %v888 = vunpack.c.0.s8 %v887
    %v889 = vlaneseq
    %v890 = vshrl.u32 %v889, 7
    %v891 = vsub.s32 %v888, %v890
    %v892 = vrot.slane %v878, %v891
    %v893 = vcombine.high %v885, %v885
    %v894 = vcombine.high %v892, %v892
    %v895 = vcombine.high %v875, %v875
    %v897 = vunpack.c.l.s4 1983009808
    %v898 = vunpack.c.0.s8 %v897
    %v899 = vlaneseq
    %v900 = vshrl.u32 %v899, 7
    %v901 = vsub.s32 %v898, %v900
    %v902 = vrot.slane %v875, %v901
    %v904 = vunpack.c.l.s4 1983009808
    %v905 = vunpack.c.0.s8 %v904
    %v906 = vlaneseq
    %v907 = vshrl.u32 %v906, 7
    %v908 = vsub.s32 %v905, %v907
    %v909 = vrot.slane %v895, %v908
    %v910 = vcombine.high %v902, %v902
    %v911 = vcombine.high %v909, %v909
    %vm920 = vcmask 1041408
    %v921 = vsel %vm920, %v885, 0.0
    %v922 = vsel %vm920, %v893, 0.0
    %v923 = vadd.f32 %v921, %v922
    %v924 = vsel %vm920, %v892, 0.0
    %v925 = vadd.f32 %v923, %v924
    %v926 = vsel %vm920, %v894, 0.0
    %v927 = vadd.f32 %v925, %v926
    %v928 = vsel %vm920, %v902, 0.0
    %v929 = vadd.f32 %v927, %v928
    %v930 = vsel %vm920, %v910, 0.0
    %v931 = vadd.f32 %v929, %v930
    %v932 = vsel %vm920, %v909, 0.0
    %v933 = vadd.f32 %v931, %v932
    %v934 = vsel %vm920, %v911, 0.0
    %v935 = vadd.f32 %v933, %v934
    %936 = vadd.xlane.f32.xlu0 %v935
    %v937 = vpop.xlane.xlu0 %936
    %v938 = vadd.f32 %v768, %v937
    %vm939 = vcmask 1024
    %940 = vst.msk [vmem:[%s7] sm:$0x3] %vm939, %v938
    %v941 = vld [vmem:[%s8] sm:$0x3]
    %v944 = vcombine.high %v766, %v766
    %v946 = vunpack.c.l.s4 1983009808
    %v947 = vunpack.c.0.s8 %v946
    %v948 = vlaneseq
    %v949 = vshrl.u32 %v948, 7
    %v950 = vsub.s32 %v947, %v949
    %v951 = vrot.slane %v766, %v950
    %v953 = vunpack.c.l.s4 1983009808
    %v954 = vunpack.c.0.s8 %v953
    %v955 = vlaneseq
    %v956 = vshrl.u32 %v955, 7
    %v957 = vsub.s32 %v954, %v956
    %v958 = vrot.slane %v944, %v957
    %v959 = vcombine.high %v951, %v951
    %v960 = vcombine.high %v958, %v958
    %v961 = vcombine.high %v767, %v767
    %v963 = vunpack.c.l.s4 1983009808
    %v964 = vunpack.c.0.s8 %v963
    %v965 = vlaneseq
    %v966 = vshrl.u32 %v965, 7
    %v967 = vsub.s32 %v964, %v966
    %v968 = vrot.slane %v767, %v967
    %v970 = vunpack.c.l.s4 1983009808
    %v971 = vunpack.c.0.s8 %v970
    %v972 = vlaneseq
    %v973 = vshrl.u32 %v972, 7
    %v974 = vsub.s32 %v971, %v973
    %v975 = vrot.slane %v961, %v974
    %v976 = vcombine.high %v968, %v968
    %v977 = vcombine.high %v975, %v975
    %v986 = vsel %vm920, %v951, 0.0
    %v987 = vsel %vm920, %v959, 0.0
    %v988 = vadd.f32 %v986, %v987
    %v989 = vsel %vm920, %v958, 0.0
    %v990 = vadd.f32 %v988, %v989
    %v991 = vsel %vm920, %v960, 0.0
    %v992 = vadd.f32 %v990, %v991
    %v993 = vsel %vm920, %v968, 0.0
    %v994 = vadd.f32 %v992, %v993
    %v995 = vsel %vm920, %v976, 0.0
    %v996 = vadd.f32 %v994, %v995
    %v997 = vsel %vm920, %v975, 0.0
    %v998 = vadd.f32 %v996, %v997
    %v999 = vsel %vm920, %v977, 0.0
    %v1000 = vadd.f32 %v998, %v999
    %1001 = vadd.xlane.f32.xlu0 %v1000
    %v1002 = vpop.xlane.xlu0 %1001
    %v1003 = vadd.f32 %v941, %v1002
    %1004 = vst.msk [vmem:[%s8] sm:$0x3] %vm939, %v1003
    %s1005 = sld [smem:[#allocation3]]
    %p1006 = scmp.eq.s32.totalorder %s1005, 1
    // Predicated region
    $region22: #{tpu_custom_call.1} parent=1 // pred_check
      %p1007 = pneg %p1006
    $region23: #{tpu_custom_call.1} parent=1 // pred_check_branch
      %1009 = sbr.rel (%p1007) target = $region25
    $region24: #{tpu_custom_call.1} parent=1 // pred_region
      %vm1010 = vcmp.eq.s32.totalorder %v82, 255
      %vm1011 = vcmp.eq.s32.totalorder %v83, 255
      %v1012 = vsel %vm1010, 1, 0
      %v1013 = vsel %vm1011, 1, 0
      %v1014 = vcvt.s32.f32 %v1012
      %v1015 = vcvt.s32.f32 %v1013
      %v1016 = vld [vmem:[%s9] sm:$0x3]
      %v1019 = vcombine.high %v1014, %v1014
      %v1021 = vunpack.c.l.s4 1983009808
      %v1022 = vunpack.c.0.s8 %v1021
      %v1023 = vlaneseq
      %v1024 = vshrl.u32 %v1023, 7
      %v1025 = vsub.s32 %v1022, %v1024
      %v1026 = vrot.slane %v1014, %v1025
      %v1028 = vunpack.c.l.s4 1983009808
      %v1029 = vunpack.c.0.s8 %v1028
      %v1030 = vlaneseq
      %v1031 = vshrl.u32 %v1030, 7
      %v1032 = vsub.s32 %v1029, %v1031
      %v1033 = vrot.slane %v1019, %v1032
      %v1034 = vcombine.high %v1026, %v1026
      %v1035 = vcombine.high %v1033, %v1033
      %v1036 = vcombine.high %v1015, %v1015
      %v1038 = vunpack.c.l.s4 1983009808
      %v1039 = vunpack.c.0.s8 %v1038
      %v1040 = vlaneseq
      %v1041 = vshrl.u32 %v1040, 7
      %v1042 = vsub.s32 %v1039, %v1041
      %v1043 = vrot.slane %v1015, %v1042
      %v1045 = vunpack.c.l.s4 1983009808
      %v1046 = vunpack.c.0.s8 %v1045
      %v1047 = vlaneseq
      %v1048 = vshrl.u32 %v1047, 7
      %v1049 = vsub.s32 %v1046, %v1048
      %v1050 = vrot.slane %v1036, %v1049
      %v1051 = vcombine.high %v1043, %v1043
      %v1052 = vcombine.high %v1050, %v1050
      %v1061 = vsel %vm920, %v1026, 0.0
      %v1062 = vsel %vm920, %v1034, 0.0
      %v1063 = vadd.f32 %v1061, %v1062
      %v1064 = vsel %vm920, %v1033, 0.0
      %v1065 = vadd.f32 %v1063, %v1064
      %v1066 = vsel %vm920, %v1035, 0.0
      %v1067 = vadd.f32 %v1065, %v1066
      %v1068 = vsel %vm920, %v1043, 0.0
      %v1069 = vadd.f32 %v1067, %v1068
      %v1070 = vsel %vm920, %v1051, 0.0
      %v1071 = vadd.f32 %v1069, %v1070
      %v1072 = vsel %vm920, %v1050, 0.0
      %v1073 = vadd.f32 %v1071, %v1072
      %v1074 = vsel %vm920, %v1052, 0.0
      %v1075 = vadd.f32 %v1073, %v1074
      %1076 = vadd.xlane.f32.xlu0 %v1075
      %v1077 = vpop.xlane.xlu0 %1076
      %v1078 = vadd.f32 %v1016, %v1077
      %1079 = vst.msk [vmem:[%s9] sm:$0x3] %vm939, %v1078
      %v1080 = vld [vmem:[#allocation13] sm:$0x3]
      %v1082 = vunpack.c.l.s4 1966171168
      %v1083 = vunpack.c.0.s8 %v1082
      %v1084 = vlaneseq
      %v1085 = vshrl.u32 %v1084, 7
      %v1086 = vsub.s32 %v1083, %v1085
      %v1087 = vrot.slane %v1014, %v1086
      %v1089 = vunpack.c.l.s4 1966171168
      %v1090 = vunpack.c.0.s8 %v1089
      %v1091 = vlaneseq
      %v1092 = vshrl.u32 %v1091, 7
      %v1093 = vsub.s32 %v1090, %v1092
      %v1094 = vrot.slane %v1015, %v1093
      %v1095 = vcombine.low %v1087, %v1094
      %v1096 = vcombine.high %v1087, %v1094
      %v1097 = vlaneseq
      %v1098 = vshrl.u32 %v1097, 7
      %v1099 = vsub.s32 0, %v1098
      %v1100 = vrot.slane %v1095, %v1099
      %v1101 = vlaneseq
      %v1102 = vshrl.u32 %v1101, 7
      %v1103 = vsub.s32 1, %v1102
      %v1104 = vrot.slane %v1095, %v1103
      %v1105 = vlaneseq
      %v1106 = vshrl.u32 %v1105, 7
      %v1107 = vsub.s32 2, %v1106
      %v1108 = vrot.slane %v1095, %v1107
      %v1109 = vlaneseq
      %v1110 = vshrl.u32 %v1109, 7
      %v1111 = vsub.s32 3, %v1110
      %v1112 = vrot.slane %v1095, %v1111
      %v1113 = vlaneseq
      %v1114 = vshrl.u32 %v1113, 7
      %v1115 = vsub.s32 4, %v1114
      %v1116 = vrot.slane %v1095, %v1115
      %v1117 = vlaneseq
      %v1118 = vshrl.u32 %v1117, 7
      %v1119 = vsub.s32 5, %v1118
      %v1120 = vrot.slane %v1095, %v1119
      %v1121 = vlaneseq
      %v1122 = vshrl.u32 %v1121, 7
      %v1123 = vsub.s32 6, %v1122
      %v1124 = vrot.slane %v1095, %v1123
      %v1125 = vlaneseq
      %v1126 = vshrl.u32 %v1125, 7
      %v1127 = vsub.s32 7, %v1126
      %v1128 = vrot.slane %v1095, %v1127
      %v1129 = vlaneseq
      %v1130 = vshrl.u32 %v1129, 7
      %v1131 = vsub.s32 0, %v1130
      %v1132 = vrot.slane %v1096, %v1131
      %v1133 = vlaneseq
      %v1134 = vshrl.u32 %v1133, 7
      %v1135 = vsub.s32 1, %v1134
      %v1136 = vrot.slane %v1096, %v1135
      %v1137 = vlaneseq
      %v1138 = vshrl.u32 %v1137, 7
      %v1139 = vsub.s32 2, %v1138
      %v1140 = vrot.slane %v1096, %v1139
      %v1141 = vlaneseq
      %v1142 = vshrl.u32 %v1141, 7
      %v1143 = vsub.s32 3, %v1142
      %v1144 = vrot.slane %v1096, %v1143
      %v1145 = vlaneseq
      %v1146 = vshrl.u32 %v1145, 7
      %v1147 = vsub.s32 4, %v1146
      %v1148 = vrot.slane %v1096, %v1147
      %v1149 = vlaneseq
      %v1150 = vshrl.u32 %v1149, 7
      %v1151 = vsub.s32 5, %v1150
      %v1152 = vrot.slane %v1096, %v1151
      %v1153 = vlaneseq
      %v1154 = vshrl.u32 %v1153, 7
      %v1155 = vsub.s32 6, %v1154
      %v1156 = vrot.slane %v1096, %v1155
      %v1157 = vlaneseq
      %v1158 = vshrl.u32 %v1157, 7
      %v1159 = vsub.s32 7, %v1158
      %v1160 = vrot.slane %v1096, %v1159
      %v1177 = vmul.f32 %v1100, %v74
      %v1178 = vmul.f32 %v1104, %v277
      %v1179 = vmul.f32 %v1108, %v75
      %v1180 = vmul.f32 %v1112, %v278
      %v1181 = vmul.f32 %v1116, %v76
      %v1182 = vmul.f32 %v1120, %v279
      %v1183 = vmul.f32 %v1124, %v77
      %v1184 = vmul.f32 %v1128, %v280
      %v1185 = vmul.f32 %v1132, %v78
      %v1186 = vmul.f32 %v1136, %v281
      %v1187 = vmul.f32 %v1140, %v79
      %v1188 = vmul.f32 %v1144, %v282
      %v1189 = vmul.f32 %v1148, %v80
      %v1190 = vmul.f32 %v1152, %v283
      %v1191 = vmul.f32 %v1156, %v81
      %v1192 = vmul.f32 %v1160, %v284
      %v1193 = vsel %vm215, %v1177, 0.0
      %v1194 = vsel %vm215, %v1178, 0.0
      %v1195 = vadd.f32 %v1193, %v1194
      %v1196 = vsel %vm215, %v1179, 0.0
      %v1197 = vadd.f32 %v1195, %v1196
      %v1198 = vsel %vm215, %v1180, 0.0
      %v1199 = vadd.f32 %v1197, %v1198
      %v1200 = vsel %vm215, %v1181, 0.0
      %v1201 = vadd.f32 %v1199, %v1200
      %v1202 = vsel %vm215, %v1182, 0.0
      %v1203 = vadd.f32 %v1201, %v1202
      %v1204 = vsel %vm215, %v1183, 0.0
      %v1205 = vadd.f32 %v1203, %v1204
      %v1206 = vsel %vm215, %v1184, 0.0
      %v1207 = vadd.f32 %v1205, %v1206
      %1208 = vadd.xlane.f32.xlu0 %v1207
      %v1209 = vpop.xlane.xlu0 %1208
      %v1210 = vsel %vm215, %v1185, 0.0
      %v1211 = vsel %vm215, %v1186, 0.0
      %v1212 = vadd.f32 %v1210, %v1211
      %v1213 = vsel %vm215, %v1187, 0.0
      %v1214 = vadd.f32 %v1212, %v1213
      %v1215 = vsel %vm215, %v1188, 0.0
      %v1216 = vadd.f32 %v1214, %v1215
      %v1217 = vsel %vm215, %v1189, 0.0
      %v1218 = vadd.f32 %v1216, %v1217
      %v1219 = vsel %vm215, %v1190, 0.0
      %v1220 = vadd.f32 %v1218, %v1219
      %v1221 = vsel %vm215, %v1191, 0.0
      %v1222 = vadd.f32 %v1220, %v1221
      %v1223 = vsel %vm215, %v1192, 0.0
      %v1224 = vadd.f32 %v1222, %v1223
      %1225 = vadd.xlane.f32.xlu0 %v1224
      %v1226 = vpop.xlane.xlu0 %1225
      %v1229 = vlaneseq
      %v1230 = vshrl.u32 %v1229, 7
      %v1231 = vsub.s32 %v253, %v1230
      %v1232 = vrot.slane %v1209, %v1231
      %v1233 = vlaneseq
      %v1234 = vshrl.u32 %v1233, 7
      %v1235 = vsub.s32 %v253, %v1234
      %v1236 = vrot.slane %v1226, %v1235
      %v1237 = vsel %vm262, %v1236, %v1232
      %v1239 = vadd.f32 %v1080, %v1237
      %1240 = vst.msk [vmem:[#allocation13] sm:$0x3] %vm266, %v1239
    $region25: #{tpu_custom_call.1} parent=1 // pred_fallthru
      _
    // Predicated region
    $region26: #{tpu_custom_call.1} parent=1 // pred_check
      _
    $region27: #{tpu_custom_call.1} parent=1 // pred_check_branch
      %1242 = sbr.rel (0) target = $region29
    $region28: #{tpu_custom_call.1} parent=1 // pred_region
      %s1244 = ssub.s32 32, 32
      %1245 = vsyncadd [#allocation6], %s1244
      %s1247 = sshll.u32 [#allocation9], 4
      %s1248 = int_to_ptr.vmem [resolvable:$true] %s1247
      %1250 = dma.vmem_to_hbm [thread:$0]  %s1248, 32, %s3, [#allocation6]
    $region29: #{tpu_custom_call.1} parent=1 // pred_fallthru
      _
    // Predicated region
    $region30: #{tpu_custom_call.1} parent=1 // pred_check
      _
    $region31: #{tpu_custom_call.1} parent=1 // pred_check_branch
      %1252 = sbr.rel (0) target = $region33
    $region32: #{tpu_custom_call.1} parent=1 // pred_region
      %s1254 = ssub.s32 32, 32
      %1255 = vsyncadd [#allocation11], %s1254
      %s1257 = sshll.u32 [#allocation10], 4
      %s1258 = int_to_ptr.vmem [resolvable:$true] %s1257
      %1260 = dma.vmem_to_hbm [thread:$0]  %s1258, 32, %s4, [#allocation11]
    $region33: #{tpu_custom_call.1} parent=1 // pred_fallthru
      _
    // Predicated region
    $region34: #{tpu_custom_call.1} parent=1 // pred_check
      _
    $region35: #{tpu_custom_call.1} parent=1 // pred_check_branch
      %1262 = sbr.rel (0) target = $region37
    $region36: #{tpu_custom_call.1} parent=1 // pred_region
      %s1264 = ssub.s32 32, 32
      %1265 = vsyncadd [#allocation11], %s1264
      %s1267 = sshll.u32 [#allocation12], 4
      %s1268 = int_to_ptr.vmem [resolvable:$true] %s1267
      %1270 = dma.vmem_to_hbm [thread:$0]  %s1268, 32, %s5, [#allocation11]
    $region37: #{tpu_custom_call.1} parent=1 // pred_fallthru
      _
    // Predicated region
    $region38: #{tpu_custom_call.1} parent=1 // pred_check
      _
    $region39: #{tpu_custom_call.1} parent=1 // pred_check_branch
      %1272 = sbr.rel (0) target = $region41
    $region40: #{tpu_custom_call.1} parent=1 // pred_region
      %s1274 = ssub.s32 32, 32
      %1275 = vsyncadd [#allocation14], %s1274
      %s1277 = sshll.u32 [#allocation13], 4
      %s1278 = int_to_ptr.vmem [resolvable:$true] %s1277
      %1280 = dma.vmem_to_hbm [thread:$0]  %s1278, 32, %s6, [#allocation14]
    $region41: #{tpu_custom_call.1} parent=1 // pred_fallthru
      _
    // Predicated region
    $region42: #{tpu_custom_call.1} parent=1 // pred_check
      _
    $region43: #{tpu_custom_call.1} parent=1 // pred_check_branch
      %1282 = sbr.rel (0) target = $region45
    $region44: #{tpu_custom_call.1} parent=1 // pred_region
      _
    $region45: #{tpu_custom_call.1} parent=1 // pred_fallthru
      _
    // Predicated region
    $region46: #{tpu_custom_call.1} parent=1 // pred_check
      _
    $region47: #{tpu_custom_call.1} parent=1 // pred_check_branch
      %1284 = sbr.rel (0) target = $region49
    $region48: #{tpu_custom_call.1} parent=1 // pred_region
      _
    $region49: #{tpu_custom_call.1} parent=1 // pred_fallthru
      _
    // Predicated region
    $region50: #{tpu_custom_call.1} parent=1 // pred_check
      _
    $region51: #{tpu_custom_call.1} parent=1 // pred_check_branch
      %1286 = sbr.rel (0) target = $region53
    $region52: #{tpu_custom_call.1} parent=1 // pred_region
      _
    $region53: #{tpu_custom_call.1} parent=1 // pred_fallthru
      _
    // Predicated region
    $region54: #{tpu_custom_call.1} parent=1 // pred_check
      _
    $region55: #{tpu_custom_call.1} parent=1 // pred_check_branch
      %1288 = sbr.rel (0) target = $region57
    $region56: #{tpu_custom_call.1} parent=1 // pred_region
      %1289 = dma.done [#allocation6], 32
    $region57: #{tpu_custom_call.1} parent=1 // pred_fallthru
      _
    // Predicated region
    $region58: #{tpu_custom_call.1} parent=1 // pred_check
      _
    $region59: #{tpu_custom_call.1} parent=1 // pred_check_branch
      %1291 = sbr.rel (0) target = $region61
    $region60: #{tpu_custom_call.1} parent=1 // pred_region
      %1292 = dma.done [#allocation11], 32
    $region61: #{tpu_custom_call.1} parent=1 // pred_fallthru
      _
    // Predicated region
    $region62: #{tpu_custom_call.1} parent=1 // pred_check
      _
    $region63: #{tpu_custom_call.1} parent=1 // pred_check_branch
      %1294 = sbr.rel (0) target = $region65
    $region64: #{tpu_custom_call.1} parent=1 // pred_region
      %1295 = dma.done [#allocation11], 32
    $region65: #{tpu_custom_call.1} parent=1 // pred_fallthru
      _
    // Predicated region
    $region66: #{tpu_custom_call.1} parent=1 // pred_check
      _
    $region67: #{tpu_custom_call.1} parent=1 // pred_check_branch
      %1297 = sbr.rel (0) target = $region69
    $region68: #{tpu_custom_call.1} parent=1 // pred_region
      %1298 = dma.done [#allocation14], 32
    $region69: #{tpu_custom_call.1} parent=1 // pred_fallthru
      _
    // Predicated region
    $region70: #{tpu_custom_call.1} parent=1 // pred_check
      _
    $region71: #{tpu_custom_call.1} parent=1 // pred_check_branch
      %1300 = sbr.rel (0) target = $region73
    $region72: #{tpu_custom_call.1} parent=1 // pred_region
      _
    $region73: #{tpu_custom_call.1} parent=1 // pred_fallthru
      _
    // Predicated region
    $region74: #{tpu_custom_call.1} parent=1 // pred_check
      _
    $region75: #{tpu_custom_call.1} parent=1 // pred_check_branch
      %1302 = sbr.rel (0) target = $region77
    $region76: #{tpu_custom_call.1} parent=1 // pred_region
      _
    $region77: #{tpu_custom_call.1} parent=1 // pred_fallthru
      _
    // Predicated region
    $region78: #{tpu_custom_call.1} parent=1 // pred_check
      _
    $region79: #{tpu_custom_call.1} parent=1 // pred_check_branch
      %1304 = sbr.rel (0) target = $region81
    $region80: #{tpu_custom_call.1} parent=1 // pred_region
      _
    $region81: #{tpu_custom_call.1} parent=1 // pred_fallthru
      _
    %1305 = vsyncpa [#allocation5], 1
    %1306 = vsyncpa [#allocation8], 1
    %1307 = vsyncpa [#allocation6], 1
    %1308 = vsyncpa [#allocation11], 1
    %1309 = vsyncpa [#allocation14], 1

</llo_original>
